<compile_context>
chip_gen: v5e
topology: v5e:2x2
jax: 0.10.0
libtpu: 0.0.40
codegen_flags: <defaults>
</compile_context>

<pallas_src>
import functools

import jax
import jax.numpy as jnp
from jax.experimental import pallas as pl
from jax.experimental.pallas import tpu as pltpu


# ----------------------------------------------------------------------------
# Pallas kernels
# ----------------------------------------------------------------------------
def _conv_block_kernel(ow, patches_ref, w_ref, b_ref, sel_ref, s_ref, pool_ref):
    """One sample: s = W @ patches + b ; act = tanh(s) ; pooled = maxpool2x2(act).

    patches_ref: (K, L)        K = Cin*25, L = oh*ow  (L is the lane axis)
    w_ref:       (Cout, K)
    b_ref:       (Cout, 1)
    sel_ref:     (L-ow-1, P)   one-hot column selector, P = (oh//2)*(ow//2)
    s_ref:       (Cout, L)     conv pre-activation (NCHW-flat)  -> s[i]
    pool_ref:    (Cout, P)     pooled tanh activation (NCHW-flat)
    """
    patches = patches_ref[...]                                   # (K, L)
    s = jnp.dot(w_ref[...], patches,
                preferred_element_type=jnp.float32) + b_ref[...]  # (Cout, L) lane-dense
    s_ref[...] = s
    act = jnp.tanh(s)

    # 2x2 / stride-2 maxpool on the row-major flattened spatial axis:
    #   horizontal pair-max, vertical pair-max (ow apart), then gather every
    #   (2*i*ow + 2*j) column with a one-hot matmul (MXU) -> dense pooled tile.
    L = act.shape[-1]
    m1 = jnp.maximum(act[:, :L - 1], act[:, 1:])                  # (Cout, L-1)
    L2 = L - 1 - ow
    m2 = jnp.maximum(m1[:, :L2], m1[:, ow:])                      # (Cout, L2)
    pool_ref[...] = jnp.dot(m2, sel_ref[...],
                            preferred_element_type=jnp.float32)   # (Cout, P)


def _tail_kernel(x_ref, w3_ref, b3_ref, w4_ref, b4_ref, w5_ref, b5_ref,
                 s3_ref, feat_ref, s4_ref, a4_ref, s5_ref):
    """conv3 (dense 400->120 at 1x1 spatial) + tanh + fc1 + tanh + fc2, fused."""
    x = x_ref[...]                                                # (bm, 400)
    s3 = jnp.dot(x, w3_ref[...], preferred_element_type=jnp.float32) + b3_ref[...]
    s3_ref[...] = s3
    f = jnp.tanh(s3)
    feat_ref[...] = f
    s4 = jnp.dot(f, w4_ref[...], preferred_element_type=jnp.float32) + b4_ref[...]
    s4_ref[...] = s4
    a4 = jnp.tanh(s4)
    a4_ref[...] = a4
    s5_ref[...] = jnp.dot(a4, w5_ref[...], preferred_element_type=jnp.float32) + b5_ref[...]


# ----------------------------------------------------------------------------
# Pallas wrappers
# ----------------------------------------------------------------------------
def _pool_selection_matrix(oh, ow):
    """One-hot (L-ow-1, P) matrix selecting columns 2*i*ow + 2*j (row-major pooled order)."""
    oho, owo = oh // 2, ow // 2
    L2 = oh * ow - ow - 1
    cols = (2 * jnp.arange(oho)[:, None] * ow + 2 * jnp.arange(owo)[None, :]).reshape(-1)
    return (jnp.arange(L2)[:, None] == cols[None, :]).astype(jnp.float32)


def conv_tanh_pool_block(patches, w, b, oh, ow):
    """Fused Conv2d(5x5, stride 1) + Tanh + MaxPool2d(2,2) from unfolded patches.

    patches: (B, Cin*25, L)   L = oh*ow  (this tensor is also the torch unfold output a[i])
    w:       (Cout, Cin, 5, 5) torch layout, b: (Cout,)
    returns  s: (B, Cout, oh, ow) pre-activation, pooled: (B, Cout, oh//2, ow//2)
    """
    B, K, L = patches.shape
    Cout = w.shape[0]
    oho, owo = oh // 2, ow // 2
    P = oho * owo
    L2 = L - ow - 1

    # Note: K = 25 / 150 is left unpadded (a[] must be exact-shape); Mosaic pads
    # the contraction dim internally and the GEMMs here are tiny.
    w_mat = w.reshape(Cout, K).astype(jnp.float32)               # (Cout, Cin*k*k)
    b_col = b.reshape(Cout, 1).astype(jnp.float32)
    sel = _pool_selection_matrix(oh, ow)                          # jit-time constant

    s_flat, pool_flat = pl.pallas_call(
        functools.partial(_conv_block_kernel, ow),
        grid=(B,),
        in_specs=[
            pl.BlockSpec((None, K, L), lambda i: (i, 0, 0)),      # per-sample patches
            pl.BlockSpec((Cout, K), lambda i: (0, 0)),            # weight (resident)
            pl.BlockSpec((Cout, 1), lambda i: (0, 0)),            # bias   (resident)
            pl.BlockSpec((L2, P), lambda i: (0, 0)),              # pool selector
        ],
        out_specs=(
            pl.BlockSpec((None, Cout, L), lambda i: (i, 0, 0)),
            pl.BlockSpec((None, Cout, P), lambda i: (i, 0, 0)),
        ),
        out_shape=(
            jax.ShapeDtypeStruct((B, Cout, L), jnp.float32),
            jax.ShapeDtypeStruct((B, Cout, P), jnp.float32),
        ),
        compiler_params=pltpu.CompilerParams(dimension_semantics=("parallel",)),
    )(patches.astype(jnp.float32), w_mat, b_col, sel)

    # Contiguous reshapes only (no transposes): (Cout, L) is already NCHW-flat.
    s = s_flat.reshape(B, Cout, oh, ow)
    pooled = pool_flat.reshape(B, Cout, oho, owo)
    return s, pooled


def fused_tail(x, conv3_w, conv3_b, fc1_w, fc1_b, fc2_w, fc2_b):
    """conv3 + tanh + fc1 + tanh + fc2 in one pallas_call.  x: (B, 400)."""
    B, K3 = x.shape
    n3 = conv3_w.shape[0]                                         # 120
    n4 = fc1_w.shape[0]                                           # 84
    n5 = fc2_w.shape[0]                                           # num_classes
    w3 = conv3_w.reshape(n3, K3).T.astype(jnp.float32)            # (400, 120)
    w4 = fc1_w.T.astype(jnp.float32)                              # (120, 84)
    w5 = fc2_w.T.astype(jnp.float32)                              # (84, n5)
    b3 = conv3_b.reshape(1, n3).astype(jnp.float32)
    b4 = fc1_b.reshape(1, n4).astype(jnp.float32)
    b5 = fc2_b.reshape(1, n5).astype(jnp.float32)

    # Batch tiling keeps the kernel VMEM-robust at training batch sizes.
    bm = B if B <= 256 else 256
    Bp = ((B + bm - 1) // bm) * bm
    xp = x.astype(jnp.float32)
    if Bp != B:
        xp = jnp.pad(xp, ((0, Bp - B), (0, 0)))

    outs = pl.pallas_call(
        _tail_kernel,
        grid=(Bp // bm,),
        in_specs=[
            pl.BlockSpec((bm, K3), lambda i: (i, 0)),
            pl.BlockSpec((K3, n3), lambda i: (0, 0)),
            pl.BlockSpec((1, n3), lambda i: (0, 0)),
            pl.BlockSpec((n3, n4), lambda i: (0, 0)),
            pl.BlockSpec((1, n4), lambda i: (0, 0)),
            pl.BlockSpec((n4, n5), lambda i: (0, 0)),
            pl.BlockSpec((1, n5), lambda i: (0, 0)),
        ],
        out_specs=tuple(pl.BlockSpec((bm, n), lambda i: (i, 0))
                        for n in (n3, n3, n4, n4, n5)),
        out_shape=tuple(jax.ShapeDtypeStruct((Bp, n), jnp.float32)
                        for n in (n3, n3, n4, n4, n5)),
        compiler_params=pltpu.CompilerParams(dimension_semantics=("parallel",)),
    )(xp, w3, b3, w4, b4, w5, b5)

    if Bp != B:
        outs = tuple(o[:B] for o in outs)
    return outs   # s3, feature, s4, a4, s5


# ----------------------------------------------------------------------------
# Glue (im2col / unfold) in plain JAX — materialized once because a[] requires it
# ----------------------------------------------------------------------------
def unfold(x, k):
    """nn.Unfold(kernel_size=(k,k)), stride 1, no padding.
    (B, C, H, W) -> (B, C*k*k, oh*ow) with column order (c, kh, kw) like PyTorch.
    Vectorized over channels: only k*k slices total (vs C*k*k naively)."""
    B, C, H, W = x.shape
    oh, ow = H - k + 1, W - k + 1
    win = jnp.stack(
        [jnp.stack([x[:, :, i:i + oh, j:j + ow] for j in range(k)], axis=0)
         for i in range(k)],
        axis=0,
    )                                            # (kh, kw, B, C, oh, ow)
    win = win.transpose(2, 3, 0, 1, 4, 5)        # (B, C, kh, kw, oh, ow)
    return win.reshape(B, C * k * k, oh * ow)


# ----------------------------------------------------------------------------
# LeNet5 parameters + forward
# ----------------------------------------------------------------------------
def init_lenet5_params(key, num_channels=1, num_classes=10):
    ks = jax.random.split(key, 10)
    p = {}
    p["conv1_w"] = 0.1 * jax.random.normal(ks[0], (6, num_channels, 5, 5), jnp.float32)
    p["conv1_b"] = 0.1 * jax.random.normal(ks[1], (6,), jnp.float32)
    p["conv2_w"] = 0.1 * jax.random.normal(ks[2], (16, 6, 5, 5), jnp.float32)
    p["conv2_b"] = 0.1 * jax.random.normal(ks[3], (16,), jnp.float32)
    p["conv3_w"] = 0.1 * jax.random.normal(ks[4], (120, 16, 5, 5), jnp.float32)
    p["conv3_b"] = 0.1 * jax.random.normal(ks[5], (120,), jnp.float32)
    p["fc1_w"] = 0.1 * jax.random.normal(ks[6], (84, 120), jnp.float32)   # torch Linear (out, in)
    p["fc1_b"] = 0.1 * jax.random.normal(ks[7], (84,), jnp.float32)
    p["fc2_w"] = 0.1 * jax.random.normal(ks[8], (num_classes, 84), jnp.float32)
    p["fc2_b"] = 0.1 * jax.random.normal(ks[9], (num_classes,), jnp.float32)
    return p


def lenet5_forward(params, img, out_feature=False):
    """Mirrors LeNet5.forward: returns (output, s, a) with tanh activations."""
    a, s = [], []
    B = img.shape[0]

    # conv1 block: unfold -> [conv + tanh + maxpool] (one fused pallas_call)
    patches1 = unfold(img, 5)                     # a[0]: (B, C*25, 784)
    a.append(patches1)
    s1, pooled1 = conv_tanh_pool_block(patches1, params["conv1_w"], params["conv1_b"], 28, 28)
    s.append(s1)                                  # s[0]: (B, 6, 28, 28)

    # conv2 block
    patches2 = unfold(pooled1, 5)                 # a[1]: (B, 150, 100)
    a.append(patches2)
    s2, pooled2 = conv_tanh_pool_block(patches2, params["conv2_w"], params["conv2_b"], 10, 10)
    s.append(s2)                                  # s[1]: (B, 16, 10, 10)

    # conv3 + fc1 + fc2 tail (one fused pallas_call); unfold at 1x1 spatial is a reshape
    patches3 = pooled2.reshape(B, 400, 1)
    a.append(patches3)                            # a[2]: (B, 400, 1)
    x400 = pooled2.reshape(B, 400)
    s3, feature, s4, a4, s5 = fused_tail(
        x400, params["conv3_w"], params["conv3_b"],
        params["fc1_w"], params["fc1_b"], params["fc2_w"], params["fc2_b"])

    s.append(s3.reshape(B, 120, 1, 1))            # s[2]: conv3 pre-activation
    a.append(feature)                             # a[3]: (B, 120)
    s.append(s4)                                  # s[3]: (B, 84)
    a.append(a4)                                  # a[4]: (B, 84)
    s.append(s5)                                  # s[4]: (B, num_classes)
    output = s5

    if not out_feature:
        return output, s, a
    return output, feature, s, a


# ----------------------------------------------------------------------------
if __name__ == "__main__":
    B, num_channels, num_classes = 2, 1, 10
    key = jax.random.PRNGKey(0)
    k_param, k_img = jax.random.split(key)

    params = init_lenet5_params(k_param, num_channels, num_classes)
    img = jax.random.normal(k_img, (B, num_channels, 32, 32), jnp.float32)

    forward = jax.jit(lenet5_forward, static_argnames=("out_feature",))
    output, s, a = forward(params, img)

    jax.block_until_ready(output)
    jax.block_until_ready(s)
    jax.block_until_ready(a)

    assert output.shape == (B, num_classes)
    assert s[0].shape == (B, 6, 28, 28) and s[1].shape == (B, 16, 10, 10)
    assert s[2].shape == (B, 120, 1, 1) and s[3].shape == (B, 84)
    assert s[4].shape == (B, num_classes)
    assert a[0].shape == (B, num_channels * 25, 784)
    assert a[1].shape == (B, 150, 100) and a[2].shape == (B, 400, 1)
    assert a[3].shape == (B, 120) and a[4].shape == (B, 84)

    print("KERNEL_OK")
</pallas_src>

<mosaic_0001>
module attributes {stable_mosaic.version = 11 : i64} {
  func.func @_conv_block_kernel(%arg0: i32, %arg1: memref<1x25x784xf32, #tpu.memory_space<vmem>>, %arg2: memref<6x25xf32, #tpu.memory_space<vmem>>, %arg3: memref<6x1xf32, #tpu.memory_space<vmem>>, %arg4: memref<755x196xf32, #tpu.memory_space<vmem>>, %arg5: memref<1x6x784xf32, #tpu.memory_space<vmem>>, %arg6: memref<1x6x196xf32, #tpu.memory_space<vmem>>) attributes {dimension_semantics = [#tpu.dimension_semantics<parallel>], iteration_bounds = array<i64: 2>, scalar_prefetch = 0 : i64, scratch_operands = 0 : i64, tpu.core_type = #tpu.core_type<tc>, window_params = [{transform_indices = @transform_0, window_bounds = array<i64: 1, 25, 784>}, {pipeline_mode = #tpu.pipeline_mode<synchronous>, transform_indices = @transform_1, window_bounds = array<i64: 6, 25>}, {pipeline_mode = #tpu.pipeline_mode<synchronous>, transform_indices = @transform_2, window_bounds = array<i64: 6, 1>}, {pipeline_mode = #tpu.pipeline_mode<synchronous>, transform_indices = @transform_3, window_bounds = array<i64: 755, 196>}, {transform_indices = @transform_4, window_bounds = array<i64: 1, 6, 784>}, {transform_indices = @transform_5, window_bounds = array<i64: 1, 6, 196>}]} {
    %c0 = arith.constant 0 : index
    %c0_0 = arith.constant 0 : index
    %c0_1 = arith.constant 0 : index
    %0 = vector.load %arg1[%c0, %c0_0, %c0_1] : memref<1x25x784xf32, #tpu.memory_space<vmem>>, vector<1x25x784xf32>
    %1 = vector.shape_cast %0 : vector<1x25x784xf32> to vector<25x784xf32>
    %c0_2 = arith.constant 0 : index
    %c0_3 = arith.constant 0 : index
    %2 = vector.load %arg2[%c0_2, %c0_3] : memref<6x25xf32, #tpu.memory_space<vmem>>, vector<6x25xf32>
    %cst = arith.constant dense<0.000000e+00> : vector<6x784xf32>
    %3 = tpu.matmul %2, %1, %cst {dimension_numbers = #tpu.dot_dimension_numbers<[1], [0], [0], [1], [0, 0, 1, 1], [], []>} : vector<6x25xf32>, vector<25x784xf32>, vector<6x784xf32> -> vector<6x784xf32>
    %c0_4 = arith.constant 0 : index
    %c0_5 = arith.constant 0 : index
    %4 = vector.load %arg3[%c0_4, %c0_5] : memref<6x1xf32, #tpu.memory_space<vmem>>, vector<6x1xf32>
    %5 = vector.broadcast %4 : vector<6x1xf32> to vector<6x784xf32>
    %6 = arith.addf %3, %5 : vector<6x784xf32>
    %c0_6 = arith.constant 0 : index
    %c0_7 = arith.constant 0 : index
    %c0_8 = arith.constant 0 : index
    %7 = vector.load %arg5[%c0_6, %c0_7, %c0_8] : memref<1x6x784xf32, #tpu.memory_space<vmem>>, vector<1x6x784xf32>
    %8 = vector.shape_cast %7 : vector<1x6x784xf32> to vector<6x784xf32>
    %9 = vector.shape_cast %6 : vector<6x784xf32> to vector<1x6x784xf32>
    tpu.vector_store %arg5[%c0_6, %c0_7, %c0_8], %9 {strides = array<i32>} : memref<1x6x784xf32, #tpu.memory_space<vmem>>, vector<1x6x784xf32>,
    %10 = math.tanh %6 : vector<6x784xf32>
    %11 = vector.extract_strided_slice %10 {offsets = [0, 0], sizes = [6, 783], strides = [1, 1]} : vector<6x784xf32> to vector<6x783xf32>
    %12 = vector.extract_strided_slice %10 {offsets = [0, 1], sizes = [6, 783], strides = [1, 1]} : vector<6x784xf32> to vector<6x783xf32>
    %13 = arith.maximumf %11, %12 : vector<6x783xf32>
    %14 = vector.extract_strided_slice %13 {offsets = [0, 0], sizes = [6, 755], strides = [1, 1]} : vector<6x783xf32> to vector<6x755xf32>
    %15 = vector.extract_strided_slice %13 {offsets = [0, 28], sizes = [6, 755], strides = [1, 1]} : vector<6x783xf32> to vector<6x755xf32>
    %16 = arith.maximumf %14, %15 : vector<6x755xf32>
    %c0_9 = arith.constant 0 : index
    %c0_10 = arith.constant 0 : index
    %17 = vector.load %arg4[%c0_9, %c0_10] : memref<755x196xf32, #tpu.memory_space<vmem>>, vector<755x196xf32>
    %cst_11 = arith.constant dense<0.000000e+00> : vector<6x196xf32>
    %18 = tpu.matmul %16, %17, %cst_11 {dimension_numbers = #tpu.dot_dimension_numbers<[1], [0], [0], [1], [0, 0, 1, 1], [], []>} : vector<6x755xf32>, vector<755x196xf32>, vector<6x196xf32> -> vector<6x196xf32>
    %c0_12 = arith.constant 0 : index
    %c0_13 = arith.constant 0 : index
    %c0_14 = arith.constant 0 : index
    %19 = vector.load %arg6[%c0_12, %c0_13, %c0_14] : memref<1x6x196xf32, #tpu.memory_space<vmem>>, vector<1x6x196xf32>
    %20 = vector.shape_cast %19 : vector<1x6x196xf32> to vector<6x196xf32>
    %21 = vector.shape_cast %18 : vector<6x196xf32> to vector<1x6x196xf32>
    tpu.vector_store %arg6[%c0_12, %c0_13, %c0_14], %21 {strides = array<i32>} : memref<1x6x196xf32, #tpu.memory_space<vmem>>, vector<1x6x196xf32>,
    return
  }
  func.func @transform_0(%arg0: i32) -> (i32, i32, i32) {
    %c0_i32 = arith.constant 0 : i32
    %c0_i32_0 = arith.constant 0 : i32
    %c0_i32_1 = arith.constant 0 : i32
    return %arg0, %c0_i32, %c0_i32_0 : i32, i32, i32
  }
  func.func @transform_1(%arg0: i32) -> (i32, i32) {
    %c0_i32 = arith.constant 0 : i32
    %c0_i32_0 = arith.constant 0 : i32
    %c0_i32_1 = arith.constant 0 : i32
    return %c0_i32, %c0_i32_0 : i32, i32
  }
  func.func @transform_2(%arg0: i32) -> (i32, i32) {
    %c0_i32 = arith.constant 0 : i32
    %c0_i32_0 = arith.constant 0 : i32
    %c0_i32_1 = arith.constant 0 : i32
    return %c0_i32, %c0_i32_0 : i32, i32
  }
  func.func @transform_3(%arg0: i32) -> (i32, i32) {
    %c0_i32 = arith.constant 0 : i32
    %c0_i32_0 = arith.constant 0 : i32
    %c0_i32_1 = arith.constant 0 : i32
    return %c0_i32, %c0_i32_0 : i32, i32
  }
  func.func @transform_4(%arg0: i32) -> (i32, i32, i32) {
    %c0_i32 = arith.constant 0 : i32
    %c0_i32_0 = arith.constant 0 : i32
    %c0_i32_1 = arith.constant 0 : i32
    return %arg0, %c0_i32, %c0_i32_0 : i32, i32, i32
  }
  func.func @transform_5(%arg0: i32) -> (i32, i32, i32) {
    %c0_i32 = arith.constant 0 : i32
    %c0_i32_0 = arith.constant 0 : i32
    %c0_i32_1 = arith.constant 0 : i32
    return %arg0, %c0_i32, %c0_i32_0 : i32, i32, i32
  }
}

module attributes {stable_mosaic.version = 11 : i64} {
  func.func @_conv_block_kernel(%arg0: i32, %arg1: memref<1x150x100xf32, #tpu.memory_space<vmem>>, %arg2: memref<16x150xf32, #tpu.memory_space<vmem>>, %arg3: memref<16x1xf32, #tpu.memory_space<vmem>>, %arg4: memref<89x25xf32, #tpu.memory_space<vmem>>, %arg5: memref<1x16x100xf32, #tpu.memory_space<vmem>>, %arg6: memref<1x16x25xf32, #tpu.memory_space<vmem>>) attributes {dimension_semantics = [#tpu.dimension_semantics<parallel>], iteration_bounds = array<i64: 2>, scalar_prefetch = 0 : i64, scratch_operands = 0 : i64, tpu.core_type = #tpu.core_type<tc>, window_params = [{transform_indices = @transform_0, window_bounds = array<i64: 1, 150, 100>}, {pipeline_mode = #tpu.pipeline_mode<synchronous>, transform_indices = @transform_1, window_bounds = array<i64: 16, 150>}, {pipeline_mode = #tpu.pipeline_mode<synchronous>, transform_indices = @transform_2, window_bounds = array<i64: 16, 1>}, {pipeline_mode = #tpu.pipeline_mode<synchronous>, transform_indices = @transform_3, window_bounds = array<i64: 89, 25>}, {transform_indices = @transform_4, window_bounds = array<i64: 1, 16, 100>}, {transform_indices = @transform_5, window_bounds = array<i64: 1, 16, 25>}]} {
    %c0 = arith.constant 0 : index
    %c0_0 = arith.constant 0 : index
    %c0_1 = arith.constant 0 : index
    %0 = vector.load %arg1[%c0, %c0_0, %c0_1] : memref<1x150x100xf32, #tpu.memory_space<vmem>>, vector<1x150x100xf32>
    %1 = vector.shape_cast %0 : vector<1x150x100xf32> to vector<150x100xf32>
    %c0_2 = arith.constant 0 : index
    %c0_3 = arith.constant 0 : index
    %2 = vector.load %arg2[%c0_2, %c0_3] : memref<16x150xf32, #tpu.memory_space<vmem>>, vector<16x150xf32>
    %cst = arith.constant dense<0.000000e+00> : vector<16x100xf32>
    %3 = tpu.matmul %2, %1, %cst {dimension_numbers = #tpu.dot_dimension_numbers<[1], [0], [0], [1], [0, 0, 1, 1], [], []>} : vector<16x150xf32>, vector<150x100xf32>, vector<16x100xf32> -> vector<16x100xf32>
    %c0_4 = arith.constant 0 : index
    %c0_5 = arith.constant 0 : index
    %4 = vector.load %arg3[%c0_4, %c0_5] : memref<16x1xf32, #tpu.memory_space<vmem>>, vector<16x1xf32>
    %5 = vector.broadcast %4 : vector<16x1xf32> to vector<16x100xf32>
    %6 = arith.addf %3, %5 : vector<16x100xf32>
    %c0_6 = arith.constant 0 : index
    %c0_7 = arith.constant 0 : index
    %c0_8 = arith.constant 0 : index
    %7 = vector.load %arg5[%c0_6, %c0_7, %c0_8] : memref<1x16x100xf32, #tpu.memory_space<vmem>>, vector<1x16x100xf32>
    %8 = vector.shape_cast %7 : vector<1x16x100xf32> to vector<16x100xf32>
    %9 = vector.shape_cast %6 : vector<16x100xf32> to vector<1x16x100xf32>
    tpu.vector_store %arg5[%c0_6, %c0_7, %c0_8], %9 {strides = array<i32>} : memref<1x16x100xf32, #tpu.memory_space<vmem>>, vector<1x16x100xf32>,
    %10 = math.tanh %6 : vector<16x100xf32>
    %11 = vector.extract_strided_slice %10 {offsets = [0, 0], sizes = [16, 99], strides = [1, 1]} : vector<16x100xf32> to vector<16x99xf32>
    %12 = vector.extract_strided_slice %10 {offsets = [0, 1], sizes = [16, 99], strides = [1, 1]} : vector<16x100xf32> to vector<16x99xf32>
    %13 = arith.maximumf %11, %12 : vector<16x99xf32>
    %14 = vector.extract_strided_slice %13 {offsets = [0, 0], sizes = [16, 89], strides = [1, 1]} : vector<16x99xf32> to vector<16x89xf32>
    %15 = vector.extract_strided_slice %13 {offsets = [0, 10], sizes = [16, 89], strides = [1, 1]} : vector<16x99xf32> to vector<16x89xf32>
    %16 = arith.maximumf %14, %15 : vector<16x89xf32>
    %c0_9 = arith.constant 0 : index
    %c0_10 = arith.constant 0 : index
    %17 = vector.load %arg4[%c0_9, %c0_10] : memref<89x25xf32, #tpu.memory_space<vmem>>, vector<89x25xf32>
    %cst_11 = arith.constant dense<0.000000e+00> : vector<16x25xf32>
    %18 = tpu.matmul %16, %17, %cst_11 {dimension_numbers = #tpu.dot_dimension_numbers<[1], [0], [0], [1], [0, 0, 1, 1], [], []>} : vector<16x89xf32>, vector<89x25xf32>, vector<16x25xf32> -> vector<16x25xf32>
    %c0_12 = arith.constant 0 : index
    %c0_13 = arith.constant 0 : index
    %c0_14 = arith.constant 0 : index
    %19 = vector.load %arg6[%c0_12, %c0_13, %c0_14] : memref<1x16x25xf32, #tpu.memory_space<vmem>>, vector<1x16x25xf32>
    %20 = vector.shape_cast %19 : vector<1x16x25xf32> to vector<16x25xf32>
    %21 = vector.shape_cast %18 : vector<16x25xf32> to vector<1x16x25xf32>
    tpu.vector_store %arg6[%c0_12, %c0_13, %c0_14], %21 {strides = array<i32>} : memref<1x16x25xf32, #tpu.memory_space<vmem>>, vector<1x16x25xf32>,
    return
  }
  func.func @transform_0(%arg0: i32) -> (i32, i32, i32) {
    %c0_i32 = arith.constant 0 : i32
    %c0_i32_0 = arith.constant 0 : i32
    %c0_i32_1 = arith.constant 0 : i32
    return %arg0, %c0_i32, %c0_i32_0 : i32, i32, i32
  }
  func.func @transform_1(%arg0: i32) -> (i32, i32) {
    %c0_i32 = arith.constant 0 : i32
    %c0_i32_0 = arith.constant 0 : i32
    %c0_i32_1 = arith.constant 0 : i32
    return %c0_i32, %c0_i32_0 : i32, i32
  }
  func.func @transform_2(%arg0: i32) -> (i32, i32) {
    %c0_i32 = arith.constant 0 : i32
    %c0_i32_0 = arith.constant 0 : i32
    %c0_i32_1 = arith.constant 0 : i32
    return %c0_i32, %c0_i32_0 : i32, i32
  }
  func.func @transform_3(%arg0: i32) -> (i32, i32) {
    %c0_i32 = arith.constant 0 : i32
    %c0_i32_0 = arith.constant 0 : i32
    %c0_i32_1 = arith.constant 0 : i32
    return %c0_i32, %c0_i32_0 : i32, i32
  }
  func.func @transform_4(%arg0: i32) -> (i32, i32, i32) {
    %c0_i32 = arith.constant 0 : i32
    %c0_i32_0 = arith.constant 0 : i32
    %c0_i32_1 = arith.constant 0 : i32
    return %arg0, %c0_i32, %c0_i32_0 : i32, i32, i32
  }
  func.func @transform_5(%arg0: i32) -> (i32, i32, i32) {
    %c0_i32 = arith.constant 0 : i32
    %c0_i32_0 = arith.constant 0 : i32
    %c0_i32_1 = arith.constant 0 : i32
    return %arg0, %c0_i32, %c0_i32_0 : i32, i32, i32
  }
}

module attributes {stable_mosaic.version = 11 : i64} {
  func.func @_tail_kernel(%arg0: i32, %arg1: memref<2x400xf32, #tpu.memory_space<vmem>>, %arg2: memref<400x120xf32, #tpu.memory_space<vmem>>, %arg3: memref<1x120xf32, #tpu.memory_space<vmem>>, %arg4: memref<120x84xf32, #tpu.memory_space<vmem>>, %arg5: memref<1x84xf32, #tpu.memory_space<vmem>>, %arg6: memref<84x10xf32, #tpu.memory_space<vmem>>, %arg7: memref<1x10xf32, #tpu.memory_space<vmem>>, %arg8: memref<2x120xf32, #tpu.memory_space<vmem>>, %arg9: memref<2x120xf32, #tpu.memory_space<vmem>>, %arg10: memref<2x84xf32, #tpu.memory_space<vmem>>, %arg11: memref<2x84xf32, #tpu.memory_space<vmem>>, %arg12: memref<2x10xf32, #tpu.memory_space<vmem>>) attributes {dimension_semantics = [#tpu.dimension_semantics<parallel>], iteration_bounds = array<i64: 1>, scalar_prefetch = 0 : i64, scratch_operands = 0 : i64, tpu.core_type = #tpu.core_type<tc>, window_params = [{transform_indices = @transform_0, window_bounds = array<i64: 2, 400>}, {pipeline_mode = #tpu.pipeline_mode<synchronous>, transform_indices = @transform_1, window_bounds = array<i64: 400, 120>}, {pipeline_mode = #tpu.pipeline_mode<synchronous>, transform_indices = @transform_2, window_bounds = array<i64: 1, 120>}, {pipeline_mode = #tpu.pipeline_mode<synchronous>, transform_indices = @transform_3, window_bounds = array<i64: 120, 84>}, {pipeline_mode = #tpu.pipeline_mode<synchronous>, transform_indices = @transform_4, window_bounds = array<i64: 1, 84>}, {pipeline_mode = #tpu.pipeline_mode<synchronous>, transform_indices = @transform_5, window_bounds = array<i64: 84, 10>}, {pipeline_mode = #tpu.pipeline_mode<synchronous>, transform_indices = @transform_6, window_bounds = array<i64: 1, 10>}, {transform_indices = @transform_7, window_bounds = array<i64: 2, 120>}, {transform_indices = @transform_8, window_bounds = array<i64: 2, 120>}, {transform_indices = @transform_9, window_bounds = array<i64: 2, 84>}, {transform_indices = @transform_10, window_bounds = array<i64: 2, 84>}, {transform_indices = @transform_11, window_bounds = array<i64: 2, 10>}]} {
    %c0 = arith.constant 0 : index
    %c0_0 = arith.constant 0 : index
    %0 = vector.load %arg1[%c0, %c0_0] : memref<2x400xf32, #tpu.memory_space<vmem>>, vector<2x400xf32>
    %c0_1 = arith.constant 0 : index
    %c0_2 = arith.constant 0 : index
    %1 = vector.load %arg2[%c0_1, %c0_2] : memref<400x120xf32, #tpu.memory_space<vmem>>, vector<400x120xf32>
    %cst = arith.constant dense<0.000000e+00> : vector<2x120xf32>
    %2 = tpu.matmul %0, %1, %cst {dimension_numbers = #tpu.dot_dimension_numbers<[1], [0], [0], [1], [0, 0, 1, 1], [], []>} : vector<2x400xf32>, vector<400x120xf32>, vector<2x120xf32> -> vector<2x120xf32>
    %c0_3 = arith.constant 0 : index
    %c0_4 = arith.constant 0 : index
    %3 = vector.load %arg3[%c0_3, %c0_4] : memref<1x120xf32, #tpu.memory_space<vmem>>, vector<1x120xf32>
    %4 = vector.broadcast %3 : vector<1x120xf32> to vector<2x120xf32>
    %5 = arith.addf %2, %4 : vector<2x120xf32>
    %c0_5 = arith.constant 0 : index
    %c0_6 = arith.constant 0 : index
    %6 = vector.load %arg8[%c0_5, %c0_6] : memref<2x120xf32, #tpu.memory_space<vmem>>, vector<2x120xf32>
    tpu.vector_store %arg8[%c0_5, %c0_6], %5 {strides = array<i32>} : memref<2x120xf32, #tpu.memory_space<vmem>>, vector<2x120xf32>,
    %7 = math.tanh %5 : vector<2x120xf32>
    %c0_7 = arith.constant 0 : index
    %c0_8 = arith.constant 0 : index
    %8 = vector.load %arg9[%c0_7, %c0_8] : memref<2x120xf32, #tpu.memory_space<vmem>>, vector<2x120xf32>
    tpu.vector_store %arg9[%c0_7, %c0_8], %7 {strides = array<i32>} : memref<2x120xf32, #tpu.memory_space<vmem>>, vector<2x120xf32>,
    %c0_9 = arith.constant 0 : index
    %c0_10 = arith.constant 0 : index
    %9 = vector.load %arg4[%c0_9, %c0_10] : memref<120x84xf32, #tpu.memory_space<vmem>>, vector<120x84xf32>
    %cst_11 = arith.constant dense<0.000000e+00> : vector<2x84xf32>
    %10 = tpu.matmul %7, %9, %cst_11 {dimension_numbers = #tpu.dot_dimension_numbers<[1], [0], [0], [1], [0, 0, 1, 1], [], []>} : vector<2x120xf32>, vector<120x84xf32>, vector<2x84xf32> -> vector<2x84xf32>
    %c0_12 = arith.constant 0 : index
    %c0_13 = arith.constant 0 : index
    %11 = vector.load %arg5[%c0_12, %c0_13] : memref<1x84xf32, #tpu.memory_space<vmem>>, vector<1x84xf32>
    %12 = vector.broadcast %11 : vector<1x84xf32> to vector<2x84xf32>
    %13 = arith.addf %10, %12 : vector<2x84xf32>
    %c0_14 = arith.constant 0 : index
    %c0_15 = arith.constant 0 : index
    %14 = vector.load %arg10[%c0_14, %c0_15] : memref<2x84xf32, #tpu.memory_space<vmem>>, vector<2x84xf32>
    tpu.vector_store %arg10[%c0_14, %c0_15], %13 {strides = array<i32>} : memref<2x84xf32, #tpu.memory_space<vmem>>, vector<2x84xf32>,
    %15 = math.tanh %13 : vector<2x84xf32>
    %c0_16 = arith.constant 0 : index
    %c0_17 = arith.constant 0 : index
    %16 = vector.load %arg11[%c0_16, %c0_17] : memref<2x84xf32, #tpu.memory_space<vmem>>, vector<2x84xf32>
    tpu.vector_store %arg11[%c0_16, %c0_17], %15 {strides = array<i32>} : memref<2x84xf32, #tpu.memory_space<vmem>>, vector<2x84xf32>,
    %c0_18 = arith.constant 0 : index
    %c0_19 = arith.constant 0 : index
    %17 = vector.load %arg6[%c0_18, %c0_19] : memref<84x10xf32, #tpu.memory_space<vmem>>, vector<84x10xf32>
    %cst_20 = arith.constant dense<0.000000e+00> : vector<2x10xf32>
    %18 = tpu.matmul %15, %17, %cst_20 {dimension_numbers = #tpu.dot_dimension_numbers<[1], [0], [0], [1], [0, 0, 1, 1], [], []>} : vector<2x84xf32>, vector<84x10xf32>, vector<2x10xf32> -> vector<2x10xf32>
    %c0_21 = arith.constant 0 : index
    %c0_22 = arith.constant 0 : index
    %19 = vector.load %arg7[%c0_21, %c0_22] : memref<1x10xf32, #tpu.memory_space<vmem>>, vector<1x10xf32>
    %20 = vector.broadcast %19 : vector<1x10xf32> to vector<2x10xf32>
    %21 = arith.addf %18, %20 : vector<2x10xf32>
    %c0_23 = arith.constant 0 : index
    %c0_24 = arith.constant 0 : index
    %22 = vector.load %arg12[%c0_23, %c0_24] : memref<2x10xf32, #tpu.memory_space<vmem>>, vector<2x10xf32>
    tpu.vector_store %arg12[%c0_23, %c0_24], %21 {strides = array<i32>} : memref<2x10xf32, #tpu.memory_space<vmem>>, vector<2x10xf32>,
    return
  }
  func.func @transform_0(%arg0: i32) -> (i32, i32) {
    %c0_i32 = arith.constant 0 : i32
    %c0_i32_0 = arith.constant 0 : i32
    return %arg0, %c0_i32 : i32, i32
  }
  func.func @transform_1(%arg0: i32) -> (i32, i32) {
    %c0_i32 = arith.constant 0 : i32
    %c0_i32_0 = arith.constant 0 : i32
    %c0_i32_1 = arith.constant 0 : i32
    return %c0_i32, %c0_i32_0 : i32, i32
  }
  func.func @transform_2(%arg0: i32) -> (i32, i32) {
    %c0_i32 = arith.constant 0 : i32
    %c0_i32_0 = arith.constant 0 : i32
    %c0_i32_1 = arith.constant 0 : i32
    return %c0_i32, %c0_i32_0 : i32, i32
  }
  func.func @transform_3(%arg0: i32) -> (i32, i32) {
    %c0_i32 = arith.constant 0 : i32
    %c0_i32_0 = arith.constant 0 : i32
    %c0_i32_1 = arith.constant 0 : i32
    return %c0_i32, %c0_i32_0 : i32, i32
  }
  func.func @transform_4(%arg0: i32) -> (i32, i32) {
    %c0_i32 = arith.constant 0 : i32
    %c0_i32_0 = arith.constant 0 : i32
    %c0_i32_1 = arith.constant 0 : i32
    return %c0_i32, %c0_i32_0 : i32, i32
  }
  func.func @transform_5(%arg0: i32) -> (i32, i32) {
    %c0_i32 = arith.constant 0 : i32
    %c0_i32_0 = arith.constant 0 : i32
    %c0_i32_1 = arith.constant 0 : i32
    return %c0_i32, %c0_i32_0 : i32, i32
  }
  func.func @transform_6(%arg0: i32) -> (i32, i32) {
    %c0_i32 = arith.constant 0 : i32
    %c0_i32_0 = arith.constant 0 : i32
    %c0_i32_1 = arith.constant 0 : i32
    return %c0_i32, %c0_i32_0 : i32, i32
  }
  func.func @transform_7(%arg0: i32) -> (i32, i32) {
    %c0_i32 = arith.constant 0 : i32
    %c0_i32_0 = arith.constant 0 : i32
    return %arg0, %c0_i32 : i32, i32
  }
  func.func @transform_8(%arg0: i32) -> (i32, i32) {
    %c0_i32 = arith.constant 0 : i32
    %c0_i32_0 = arith.constant 0 : i32
    return %arg0, %c0_i32 : i32, i32
  }
  func.func @transform_9(%arg0: i32) -> (i32, i32) {
    %c0_i32 = arith.constant 0 : i32
    %c0_i32_0 = arith.constant 0 : i32
    return %arg0, %c0_i32 : i32, i32
  }
  func.func @transform_10(%arg0: i32) -> (i32, i32) {
    %c0_i32 = arith.constant 0 : i32
    %c0_i32_0 = arith.constant 0 : i32
    return %arg0, %c0_i32 : i32, i32
  }
  func.func @transform_11(%arg0: i32) -> (i32, i32) {
    %c0_i32 = arith.constant 0 : i32
    %c0_i32_0 = arith.constant 0 : i32
    return %arg0, %c0_i32 : i32, i32
  }
}

</mosaic_0001>

<llo_original>
// kernel: lenet5_forward.3
$region0: #{lenet5_forward.3}
  #allocation0 [shape = 'u32[]', space=smem, size = 0x4, offset = 0x4, fixed_abs, tag = 'smem constant byte address 0x4 - core index']
  #allocation1 [shape = 'u32[72,128]{1,0:T(1,128)}', space=vmem, size = 0x9000, scoped, tag = 'internal scratch']
  %s0 = inlined_call_operand.vmem [shape: f32[2,25,784], index: 0, kind: input, shape index: {}]
  %s1 = inlined_call_operand.vmem [shape: f32[6,25], index: 1, kind: input, shape index: {}]
  %s2 = inlined_call_operand.vmem [shape: f32[6,1], index: 2, kind: input, shape index: {}]
  %s3 = inlined_call_operand.vmem [shape: f32[755,196], index: 3, kind: input, shape index: {}]
  %s4 = inlined_call_operand.vmem [shape: f32[2,6,784], index: 4, kind: output, shape index: {0}]
  %s5 = inlined_call_operand.vmem [shape: f32[2,6,196], index: 5, kind: output, shape index: {1}]
  %6 = xla_tuple %s4, %s5
  %s7 = sld [smem:[#allocation0]]
  $region57: #{lenet5_forward.3} parent=0
    _
  %s9 = ssub.s32 1, %s7
  %s10 = scalar_select 0, %s9, %s7
  loop: start=0, step=1, limit=4
  $region2: #{lenet5_forward.3} parent=0 // loop_pre_header
    _
  $region3: #{lenet5_forward.3} parent=0 // loop_header
    %s12 = sphi 0, %s16
    %p13 = scmp.ge.s32.totalorder %s12, 4
    %s22 = sphi 0, %s24
    %s25 = sphi 0, %s22
    %s26 = sphi 0, %s25
    %s42 = sphi 0, %s26
    %s46 = sphi 0, %s46
    %s48 = sphi 0, %s46
    %s49 = sphi 0, %s48
    %s63 = sphi 0, %s49
    %s67 = sphi 0, %s67
    %s69 = sphi 0, %s67
    %s70 = sphi 0, %s69
    %s84 = sphi 0, %s70
    %s88 = sphi 0, %s88
    %s90 = sphi 0, %s88
    %s91 = sphi 0, %s90
    %s105 = sphi 0, %s91
    %s111 = sphi 0, %s113
    %s114 = sphi 0, %s111
    %s115 = sphi 0, %s114
    %s131 = sphi 0, %s115
    %s137 = sphi 0, %s139
    %s140 = sphi 0, %s137
    %s141 = sphi 0, %s140
    %s157 = sphi 0, %s141
  $region4: #{lenet5_forward.3} parent=0 // loop_header_branch
    %15 = sbr.rel (%p13) target = $region8
  $region5: #{lenet5_forward.3} parent=0 // loop_body
    %s17 = ssub.s32 %s12, 1
    %s18 = ssub.s32 %s12, 2
    %s19 = sadd.s32 %s12, 1
    %s20 = ssub.s32 %s12, %s19
    %p21 = scmp.eq.s32.totalorder %s20, 0
    %s23 = sadd.s32 %s22, 1
    %s24 = scalar_select %p21, %s22, %s23
    %p27 = pneg %p21
    %p28 = scmp.eq.s32.totalorder %s12, 1
    %p29 = por %p27, %p28
    %p30 = scmp.ne.s32.totalorder %s22, %s25
    %p31 = scmp.eq.s32.totalorder %s12, 0
    %p32 = por %p30, %p31
    %p33 = scmp.ne.s32.totalorder %s22, %s25
    %p34 = scmp.eq.s32.totalorder %s17, 1
    %p35 = por %p33, %p34
    %p36 = scmp.ne.s32.totalorder %s25, %s26
    %p37 = scmp.eq.s32.totalorder %s17, 0
    %p38 = por %p36, %p37
    %p39 = scmp.ne.s32.totalorder %s25, %s26
    %p40 = scmp.eq.s32.totalorder %s18, 1
    %p41 = por %p39, %p40
    %p43 = scmp.ne.s32.totalorder %s26, %s42
    %p44 = scmp.eq.s32.totalorder %s18, 0
    %p45 = por %p43, %p44
    %s47 = sadd.s32 %s46, 1
    %p50 = scmp.eq.s32.totalorder %s12, 1
    %p51 = scmp.ne.s32.totalorder %s46, %s48
    %p52 = scmp.eq.s32.totalorder %s12, 0
    %p53 = por %p51, %p52
    %p54 = scmp.ne.s32.totalorder %s46, %s48
    %p55 = scmp.eq.s32.totalorder %s17, 1
    %p56 = por %p54, %p55
    %p57 = scmp.ne.s32.totalorder %s48, %s49
    %p58 = scmp.eq.s32.totalorder %s17, 0
    %p59 = por %p57, %p58
    %p60 = scmp.ne.s32.totalorder %s48, %s49
    %p61 = scmp.eq.s32.totalorder %s18, 1
    %p62 = por %p60, %p61
    %p64 = scmp.ne.s32.totalorder %s49, %s63
    %p65 = scmp.eq.s32.totalorder %s18, 0
    %p66 = por %p64, %p65
    %s68 = sadd.s32 %s67, 1
    %p71 = scmp.eq.s32.totalorder %s12, 1
    %p72 = scmp.ne.s32.totalorder %s67, %s69
    %p73 = scmp.eq.s32.totalorder %s12, 0
    %p74 = por %p72, %p73
    %p75 = scmp.ne.s32.totalorder %s67, %s69
    %p76 = scmp.eq.s32.totalorder %s17, 1
    %p77 = por %p75, %p76
    %p78 = scmp.ne.s32.totalorder %s69, %s70
    %p79 = scmp.eq.s32.totalorder %s17, 0
    %p80 = por %p78, %p79
    %p81 = scmp.ne.s32.totalorder %s69, %s70
    %p82 = scmp.eq.s32.totalorder %s18, 1
    %p83 = por %p81, %p82
    %p85 = scmp.ne.s32.totalorder %s70, %s84
    %p86 = scmp.eq.s32.totalorder %s18, 0
    %p87 = por %p85, %p86
    %s89 = sadd.s32 %s88, 1
    %p92 = scmp.eq.s32.totalorder %s12, 1
    %p93 = scmp.ne.s32.totalorder %s88, %s90
    %p94 = scmp.eq.s32.totalorder %s12, 0
    %p95 = por %p93, %p94
    %p96 = scmp.ne.s32.totalorder %s88, %s90
    %p97 = scmp.eq.s32.totalorder %s17, 1
    %p98 = por %p96, %p97
    %p99 = scmp.ne.s32.totalorder %s90, %s91
    %p100 = scmp.eq.s32.totalorder %s17, 0
    %p101 = por %p99, %p100
    %p102 = scmp.ne.s32.totalorder %s90, %s91
    %p103 = scmp.eq.s32.totalorder %s18, 1
    %p104 = por %p102, %p103
    %p106 = scmp.ne.s32.totalorder %s91, %s105
    %p107 = scmp.eq.s32.totalorder %s18, 0
    %p108 = por %p106, %p107
    %s109 = ssub.s32 %s12, %s19
    %p110 = scmp.eq.s32.totalorder %s109, 0
    %s112 = sadd.s32 %s111, 1
    %s113 = scalar_select %p110, %s111, %s112
    %p116 = pneg %p110
    %p117 = scmp.eq.s32.totalorder %s12, 1
    %p118 = por %p116, %p117
    %p119 = scmp.ne.s32.totalorder %s111, %s114
    %p120 = scmp.eq.s32.totalorder %s12, 0
    %p121 = por %p119, %p120
    %p122 = scmp.ne.s32.totalorder %s111, %s114
    %p123 = scmp.eq.s32.totalorder %s17, 1
    %p124 = por %p122, %p123
    %p125 = scmp.ne.s32.totalorder %s114, %s115
    %p126 = scmp.eq.s32.totalorder %s17, 0
    %p127 = por %p125, %p126
    %p128 = scmp.ne.s32.totalorder %s114, %s115
    %p129 = scmp.eq.s32.totalorder %s18, 1
    %p130 = por %p128, %p129
    %p132 = scmp.ne.s32.totalorder %s115, %s131
    %p133 = scmp.eq.s32.totalorder %s18, 0
    %p134 = por %p132, %p133
    %s135 = ssub.s32 %s12, %s19
    %p136 = scmp.eq.s32.totalorder %s135, 0
    %s138 = sadd.s32 %s137, 1
    %s139 = scalar_select %p136, %s137, %s138
    %p142 = pneg %p136
    %p143 = scmp.eq.s32.totalorder %s12, 1
    %p144 = por %p142, %p143
    %p145 = scmp.ne.s32.totalorder %s137, %s140
    %p146 = scmp.eq.s32.totalorder %s12, 0
    %p147 = por %p145, %p146
    %p148 = scmp.ne.s32.totalorder %s137, %s140
    %p149 = scmp.eq.s32.totalorder %s17, 1
    %p150 = por %p148, %p149
    %p151 = scmp.ne.s32.totalorder %s140, %s141
    %p152 = scmp.eq.s32.totalorder %s17, 0
    %p153 = por %p151, %p152
    %p154 = scmp.ne.s32.totalorder %s140, %s141
    %p155 = scmp.eq.s32.totalorder %s18, 1
    %p156 = por %p154, %p155
    %p158 = scmp.ne.s32.totalorder %s141, %s157
    %p159 = scmp.eq.s32.totalorder %s18, 0
    %p160 = por %p158, %p159
    %p161 = scmp.le.s32.totalorder 1, %s12
    %p162 = scmp.lt.s32.totalorder %s12, 3
    %p163 = pnand %p161, %p162
    %p164 = pneg %p163
    // Predicated region
    $region9: #{lenet5_forward.3} parent=5 // pred_check
      _
    $region10: #{lenet5_forward.3} parent=5 // pred_check_branch
      %166 = sbr.rel (%p163) target = $region12
    $region11: #{lenet5_forward.3} parent=5 // pred_region
      %s167 = ssub.s32 %s12, 1
      // Predicated region
      $region13: #{lenet5_forward.3} parent=11 // pred_check
        %p168 = pneg %p59
      $region14: #{lenet5_forward.3} parent=11 // pred_check_branch
        %170 = sbr.rel (%p168) target = $region16
      $region15: #{lenet5_forward.3} parent=11 // pred_region
        _
      $region16: #{lenet5_forward.3} parent=11 // pred_fallthru
        _
      // Predicated region
      $region17: #{lenet5_forward.3} parent=11 // pred_check
        %p171 = pneg %p80
      $region18: #{lenet5_forward.3} parent=11 // pred_check_branch
        %173 = sbr.rel (%p171) target = $region20
      $region19: #{lenet5_forward.3} parent=11 // pred_region
        _
      $region20: #{lenet5_forward.3} parent=11 // pred_fallthru
        _
      // Predicated region
      $region21: #{lenet5_forward.3} parent=11 // pred_check
        %p174 = pneg %p101
      $region22: #{lenet5_forward.3} parent=11 // pred_check_branch
        %176 = sbr.rel (%p174) target = $region24
      $region23: #{lenet5_forward.3} parent=11 // pred_region
        _
      $region24: #{lenet5_forward.3} parent=11 // pred_fallthru
        _
    $region12: #{lenet5_forward.3} parent=5 // pred_fallthru
      _
    %p177 = scmp.lt.s32.totalorder %s12, 2
    // Predicated region
    $region25: #{lenet5_forward.3} parent=5 // pred_check
      %p178 = pneg %p177
    $region26: #{lenet5_forward.3} parent=5 // pred_check_branch
      %180 = sbr.rel (%p178) target = $region28
    $region27: #{lenet5_forward.3} parent=5 // pred_region
      // Predicated region
      $region29: #{lenet5_forward.3} parent=27 // pred_check
        %p181 = pneg %p32
      $region30: #{lenet5_forward.3} parent=27 // pred_check_branch
        %183 = sbr.rel (%p181) target = $region32
      $region31: #{lenet5_forward.3} parent=27 // pred_region
        %p184 = scmp.lt.s32.totalorder %s12, 1
        %s185 = scalar_select %p184, %s12, 1
        %s186 = smul.addr %s185, 28
        %s187 = smul.addr %s186, 8
        %s188 = scalar_lea.vmem %s0, %s187
      $region32: #{lenet5_forward.3} parent=27 // pred_fallthru
        _
    $region28: #{lenet5_forward.3} parent=5 // pred_fallthru
      _
    %p189 = scmp.le.s32.totalorder 1, %s12
    %p190 = scmp.lt.s32.totalorder %s12, 3
    %p191 = pnand %p189, %p190
    %p192 = pneg %p191
    // Predicated region
    $region33: #{lenet5_forward.3} parent=5 // pred_check
      _
    $region34: #{lenet5_forward.3} parent=5 // pred_check_branch
      %194 = sbr.rel (%p191) target = $region36
    $region35: #{lenet5_forward.3} parent=5 // pred_region
      %s195 = ssub.s32 %s12, 1
      %p196 = scmp.lt.s32.totalorder %s17, 1
      %s197 = scalar_select %p196, %s17, 1
      %s198 = smul.addr %s197, 28
      %s199 = smul.addr %s198, 8
      %s200 = scalar_lea.vmem %s0, %s199
      %p201 = pneg %p38
      %p202 = pneg %p35
      %p203 = pneg %p59
      %p204 = pneg %p56
      %p205 = pneg %p80
      %p206 = pneg %p77
      %p207 = pneg %p101
      %p208 = pneg %p98
      %p209 = pneg %p127
      %p210 = pneg %p124
      %p211 = scmp.lt.s32.totalorder %s17, 1
      %s212 = scalar_select %p211, %s17, 1
      %s213 = smul.addr %s212, 7
      %s214 = smul.addr %s213, 8
      %s215 = scalar_lea.vmem %s4, %s214
      %p216 = pneg %p153
      %p217 = pneg %p150
      %p218 = scmp.lt.s32.totalorder %s17, 1
      %s219 = scalar_select %p218, %s17, 1
      %s220 = smul.addr %s219, 2
      %s221 = smul.addr %s220, 8
      %s222 = scalar_lea.vmem %s5, %s221
      %p223 = scmp.lt.s32.totalorder %s17, 1
      %s224 = scalar_select %p223, %s17, 1
      %s225 = smul.addr %s224, 28
      %s226 = smul.addr %s225, 8
      %s227 = scalar_lea.vmem %s0, %s226
      %p228 = scmp.lt.s32.totalorder %s17, 1
      %s229 = scalar_select %p228, %s17, 1
      %s230 = smul.addr %s229, 7
      %s231 = smul.addr %s230, 8
      %s232 = scalar_lea.vmem %s4, %s231
      %p233 = scmp.lt.s32.totalorder %s17, 1
      %s234 = scalar_select %p233, %s17, 1
      %s235 = smul.addr %s234, 2
      %s236 = smul.addr %s235, 8
      %s237 = scalar_lea.vmem %s5, %s236
      %v238 = vld [vmem:[%s227] sm:$0xff]
      %v239 = vld [vmem:[%s227 + $0x8] sm:$0xff]
      %v240 = vld [vmem:[%s227 + $0x10] sm:$0xff]
      %v241 = vld [vmem:[%s227 + $0x18] sm:$0xff]
      %v242 = vld [vmem:[%s227 + $0x20] sm:$0xff]
      %v243 = vld [vmem:[%s227 + $0x28] sm:$0xff]
      %v244 = vld [vmem:[%s227 + $0x30] sm:$0xff]
      %v245 = vld [vmem:[%s227 + $0x38] sm:$0xff]
      %v246 = vld [vmem:[%s227 + $0x40] sm:$0xff]
      %v247 = vld [vmem:[%s227 + $0x48] sm:$0xff]
      %v248 = vld [vmem:[%s227 + $0x50] sm:$0xff]
      %v249 = vld [vmem:[%s227 + $0x58] sm:$0xff]
      %v250 = vld [vmem:[%s227 + $0x60] sm:$0xff]
      %v251 = vld [vmem:[%s227 + $0x68] sm:$0xff]
      %v252 = vld [vmem:[%s227 + $0x70] sm:$0xff]
      %v253 = vld [vmem:[%s227 + $0x78] sm:$0xff]
      %v254 = vld [vmem:[%s227 + $0x80] sm:$0xff]
      %v255 = vld [vmem:[%s227 + $0x88] sm:$0xff]
      %v256 = vld [vmem:[%s227 + $0x90] sm:$0xff]
      %v257 = vld [vmem:[%s227 + $0x98] sm:$0xff]
      %v258 = vld [vmem:[%s227 + $0xa0] sm:$0xff]
      %v259 = vld [vmem:[%s227 + $0xa8] sm:$0x1]
      %v260 = vld [vmem:[%s227 + $0xb0] sm:$0x1]
      %v261 = vld [vmem:[%s227 + $0xb8] sm:$0x1]
      %v262 = vld [vmem:[%s227 + $0xc0] sm:$0x1]
      %v263 = vld [vmem:[%s227 + $0xc8] sm:$0x1]
      %v264 = vld [vmem:[%s227 + $0xd0] sm:$0x1]
      %v265 = vld [vmem:[%s227 + $0xd8] sm:$0x1]
      %v266 = vld [vmem:[%s1] sm:$0x3f]
      %v267 = vld [vmem:[%s2] sm:$0x3f]
      %269 = vset.pattern.permute.xlu0 0
      %270 = vperm.xlu0 %269, %v267
      %v271 = vpop.permute.xlu0 %270
      %vm273 = vcmask 203776
      %v275 = vsel %vm273, %v266, 0
      %vm277 = vcmask 1040384
      %v279 = vsel %vm277, %v259, 0
      %v282 = vsel %vm277, %v260, 0
      %v285 = vsel %vm277, %v261, 0
      %v288 = vsel %vm277, %v262, 0
      %v291 = vsel %vm277, %v263, 0
      %v294 = vsel %vm277, %v264, 0
      %v297 = vsel %vm277, %v265, 0
      %299 = vmatpush.msra.mxu0 0.0
      %300 = vmatpush.msra.mxu0 0.0
      %301 = vmatpush.msra.mxu0 0.0
      %302 = vmatpush.msra.mxu0 0.0
      %303 = vmatpush.msra.mxu0 0.0
      %304 = vmatpush.msra.mxu0 0.0
      %305 = vmatpush.msra.mxu0 0.0
      %306 = vmatpush.msra.mxu0 0.0
      %307 = vmatpush.msra.mxu0 0.0
      %308 = vmatpush.msra.mxu0 0.0
      %309 = vmatpush.msra.mxu0 0.0
      %310 = vmatpush.msra.mxu0 0.0
      %311 = vmatpush.msra.mxu0 %v279
      %312 = vmatpush.msra.mxu0 %v252
      %313 = vmatpush.msra.mxu0 %v245
      %314 = vmatpush.msra.mxu0 %v238
      %315 = vmatmul.f32.gmra.mxu0 %v275
      %v316 = vpop.f32.mrf.mxu0
      %v317 = vadd.f32 %v271, %v316
      %318 = vdwg.mxu0
      %319 = vmatpush.msra.mxu0 0.0
      %320 = vmatpush.msra.mxu0 0.0
      %321 = vmatpush.msra.mxu0 0.0
      %322 = vmatpush.msra.mxu0 0.0
      %323 = vmatpush.msra.mxu0 0.0
      %324 = vmatpush.msra.mxu0 0.0
      %325 = vmatpush.msra.mxu0 0.0
      %326 = vmatpush.msra.mxu0 0.0
      %327 = vmatpush.msra.mxu0 0.0
      %328 = vmatpush.msra.mxu0 0.0
      %329 = vmatpush.msra.mxu0 0.0
      %330 = vmatpush.msra.mxu0 0.0
      %331 = vmatpush.msra.mxu0 %v282
      %332 = vmatpush.msra.mxu0 %v253
      %333 = vmatpush.msra.mxu0 %v246
      %334 = vmatpush.msra.mxu0 %v239
      %335 = vmatmul.f32.gmra.mxu0 %v275
      %v336 = vpop.f32.mrf.mxu0
      %v337 = vadd.f32 %v271, %v336
      %338 = vdwg.mxu0
      %339 = vmatpush.msra.mxu0 0.0
      %340 = vmatpush.msra.mxu0 0.0
      %341 = vmatpush.msra.mxu0 0.0
      %342 = vmatpush.msra.mxu0 0.0
      %343 = vmatpush.msra.mxu0 0.0
      %344 = vmatpush.msra.mxu0 0.0
      %345 = vmatpush.msra.mxu0 0.0
      %346 = vmatpush.msra.mxu0 0.0
      %347 = vmatpush.msra.mxu0 0.0
      %348 = vmatpush.msra.mxu0 0.0
      %349 = vmatpush.msra.mxu0 0.0
      %350 = vmatpush.msra.mxu0 0.0
      %351 = vmatpush.msra.mxu0 %v285
      %352 = vmatpush.msra.mxu0 %v254
      %353 = vmatpush.msra.mxu0 %v247
      %354 = vmatpush.msra.mxu0 %v240
      %355 = vmatmul.f32.gmra.mxu0 %v275
      %v356 = vpop.f32.mrf.mxu0
      %v357 = vadd.f32 %v271, %v356
      %358 = vdwg.mxu0
      %359 = vmatpush.msra.mxu0 0.0
      %360 = vmatpush.msra.mxu0 0.0
      %361 = vmatpush.msra.mxu0 0.0
      %362 = vmatpush.msra.mxu0 0.0
      %363 = vmatpush.msra.mxu0 0.0
      %364 = vmatpush.msra.mxu0 0.0
      %365 = vmatpush.msra.mxu0 0.0
      %366 = vmatpush.msra.mxu0 0.0
      %367 = vmatpush.msra.mxu0 0.0
      %368 = vmatpush.msra.mxu0 0.0
      %369 = vmatpush.msra.mxu0 0.0
      %370 = vmatpush.msra.mxu0 0.0
      %371 = vmatpush.msra.mxu0 %v288
      %372 = vmatpush.msra.mxu0 %v255
      %373 = vmatpush.msra.mxu0 %v248
      %374 = vmatpush.msra.mxu0 %v241
      %375 = vmatmul.f32.gmra.mxu0 %v275
      %v376 = vpop.f32.mrf.mxu0
      %v377 = vadd.f32 %v271, %v376
      %378 = vdwg.mxu0
      %379 = vmatpush.msra.mxu0 0.0
      %380 = vmatpush.msra.mxu0 0.0
      %381 = vmatpush.msra.mxu0 0.0
      %382 = vmatpush.msra.mxu0 0.0
      %383 = vmatpush.msra.mxu0 0.0
      %384 = vmatpush.msra.mxu0 0.0
      %385 = vmatpush.msra.mxu0 0.0
      %386 = vmatpush.msra.mxu0 0.0
      %387 = vmatpush.msra.mxu0 0.0
      %388 = vmatpush.msra.mxu0 0.0
      %389 = vmatpush.msra.mxu0 0.0
      %390 = vmatpush.msra.mxu0 0.0
      %391 = vmatpush.msra.mxu0 %v291
      %392 = vmatpush.msra.mxu0 %v256
      %393 = vmatpush.msra.mxu0 %v249
      %394 = vmatpush.msra.mxu0 %v242
      %395 = vmatmul.f32.gmra.mxu0 %v275
      %v396 = vpop.f32.mrf.mxu0
      %v397 = vadd.f32 %v271, %v396
      %398 = vdwg.mxu0
      %399 = vmatpush.msra.mxu0 0.0
      %400 = vmatpush.msra.mxu0 0.0
      %401 = vmatpush.msra.mxu0 0.0
      %402 = vmatpush.msra.mxu0 0.0
      %403 = vmatpush.msra.mxu0 0.0
      %404 = vmatpush.msra.mxu0 0.0
      %405 = vmatpush.msra.mxu0 0.0
      %406 = vmatpush.msra.mxu0 0.0
      %407 = vmatpush.msra.mxu0 0.0
      %408 = vmatpush.msra.mxu0 0.0
      %409 = vmatpush.msra.mxu0 0.0
      %410 = vmatpush.msra.mxu0 0.0
      %411 = vmatpush.msra.mxu0 %v294
      %412 = vmatpush.msra.mxu0 %v257
      %413 = vmatpush.msra.mxu0 %v250
      %414 = vmatpush.msra.mxu0 %v243
      %415 = vmatmul.f32.gmra.mxu0 %v275
      %v416 = vpop.f32.mrf.mxu0
      %v417 = vadd.f32 %v271, %v416
      %418 = vdwg.mxu0
      %419 = vmatpush.msra.mxu0 0.0
      %420 = vmatpush.msra.mxu0 0.0
      %421 = vmatpush.msra.mxu0 0.0
      %422 = vmatpush.msra.mxu0 0.0
      %423 = vmatpush.msra.mxu0 0.0
      %424 = vmatpush.msra.mxu0 0.0
      %425 = vmatpush.msra.mxu0 0.0
      %426 = vmatpush.msra.mxu0 0.0
      %427 = vmatpush.msra.mxu0 0.0
      %428 = vmatpush.msra.mxu0 0.0
      %429 = vmatpush.msra.mxu0 0.0
      %430 = vmatpush.msra.mxu0 0.0
      %431 = vmatpush.msra.mxu0 %v297
      %432 = vmatpush.msra.mxu0 %v258
      %433 = vmatpush.msra.mxu0 %v251
      %434 = vmatpush.msra.mxu0 %v244
      %435 = vmatmul.f32.gmra.mxu0 %v275
      %v436 = vpop.f32.mrf.mxu0
      %v437 = vadd.f32 %v271, %v436
      %438 = vdwg.mxu0
      %439 = vst [vmem:[%s232] sm:$0x3f] %v317
      %440 = vst [vmem:[%s232 + $0x8] sm:$0x3f] %v337
      %441 = vst [vmem:[%s232 + $0x10] sm:$0x3f] %v357
      %442 = vst [vmem:[%s232 + $0x18] sm:$0x3f] %v377
      %443 = vst [vmem:[%s232 + $0x20] sm:$0x3f] %v397
      %444 = vst [vmem:[%s232 + $0x28] sm:$0x3f] %v417
      %vm445 = vcmask 128000
      %446 = vst.msk [vmem:[%s232 + $0x30] sm:$0x3f] %vm445, %v437
      %v447 = vtanh.pop %v317
      %v448 = vtanh.pop %v337
      %v449 = vtanh.pop %v357
      %v450 = vtanh.pop %v377
      %v451 = vtanh.pop %v397
      %v452 = vtanh.pop %v417
      %v453 = vtanh.pop %v437
      %461 = vrot.lane.b32.xlu0 %v447, 127
      %v462 = vpop.permute.xlu0 %461
      %463 = vrot.lane.b32.xlu0 %v448, 127
      %v464 = vpop.permute.xlu0 %463
      %465 = vrot.lane.b32.xlu0 %v449, 127
      %v466 = vpop.permute.xlu0 %465
      %467 = vrot.lane.b32.xlu0 %v450, 127
      %v468 = vpop.permute.xlu0 %467
      %469 = vrot.lane.b32.xlu0 %v451, 127
      %v470 = vpop.permute.xlu0 %469
      %471 = vrot.lane.b32.xlu0 %v452, 127
      %v472 = vpop.permute.xlu0 %471
      %473 = vrot.lane.b32.xlu0 %v453, 127
      %v474 = vpop.permute.xlu0 %473
      %vm475 = vcmask 1039360
      %v476 = vsel %vm475, %v462, %v464
      %v477 = vsel %vm475, %v464, %v466
      %v478 = vsel %vm475, %v466, %v468
      %v479 = vsel %vm475, %v468, %v470
      %v480 = vsel %vm475, %v470, %v472
      %v481 = vsel %vm475, %v472, %v474
      %v489 = vmax.f32 %v447, %v476
      %v490 = vmax.f32 %v448, %v477
      %v491 = vmax.f32 %v449, %v478
      %v492 = vmax.f32 %v450, %v479
      %v493 = vmax.f32 %v451, %v480
      %v494 = vmax.f32 %v452, %v481
      %v495 = vmax.f32 %v453, %v474
      %503 = vrot.lane.b32.xlu0 %v489, 100
      %v504 = vpop.permute.xlu0 %503
      %505 = vrot.lane.b32.xlu0 %v490, 100
      %v506 = vpop.permute.xlu0 %505
      %507 = vrot.lane.b32.xlu0 %v491, 100
      %v508 = vpop.permute.xlu0 %507
      %509 = vrot.lane.b32.xlu0 %v492, 100
      %v510 = vpop.permute.xlu0 %509
      %511 = vrot.lane.b32.xlu0 %v493, 100
      %v512 = vpop.permute.xlu0 %511
      %513 = vrot.lane.b32.xlu0 %v494, 100
      %v514 = vpop.permute.xlu0 %513
      %515 = vrot.lane.b32.xlu0 %v495, 100
      %v516 = vpop.permute.xlu0 %515
      %vm517 = vcmask 818176
      %v518 = vsel %vm517, %v504, %v506
      %v519 = vsel %vm517, %v506, %v508
      %v520 = vsel %vm517, %v508, %v510
      %v521 = vsel %vm517, %v510, %v512
      %v522 = vsel %vm517, %v512, %v514
      %v523 = vsel %vm517, %v514, %v516
      %v530 = vmax.f32 %v489, %v518
      %v531 = vmax.f32 %v490, %v519
      %v532 = vmax.f32 %v491, %v520
      %v533 = vmax.f32 %v492, %v521
      %v534 = vmax.f32 %v493, %v522
      %v535 = vmax.f32 %v494, %v523
      %v536 = vld [vmem:[%s3] sm:$0xff]
      %v537 = vld [vmem:[%s3 + $0x8] sm:$0xff]
      %v538 = vld [vmem:[%s3 + $0x10] sm:$0xff]
      %v539 = vld [vmem:[%s3 + $0x18] sm:$0xff]
      %v540 = vld [vmem:[%s3 + $0x20] sm:$0xff]
      %v541 = vld [vmem:[%s3 + $0x28] sm:$0xff]
      %v542 = vld [vmem:[%s3 + $0x30] sm:$0xff]
      %v543 = vld [vmem:[%s3 + $0x38] sm:$0xff]
      %v544 = vld [vmem:[%s3 + $0x40] sm:$0xff]
      %v545 = vld [vmem:[%s3 + $0x48] sm:$0xff]
      %v546 = vld [vmem:[%s3 + $0x50] sm:$0xff]
      %v547 = vld [vmem:[%s3 + $0x58] sm:$0xff]
      %v548 = vld [vmem:[%s3 + $0x60] sm:$0xff]
      %v549 = vld [vmem:[%s3 + $0x68] sm:$0xff]
      %v550 = vld [vmem:[%s3 + $0x70] sm:$0xff]
      %v551 = vld [vmem:[%s3 + $0x78] sm:$0xff]
      %v552 = vld [vmem:[%s3 + $0x80] sm:$0xff]
      %v553 = vld [vmem:[%s3 + $0x88] sm:$0xff]
      %v554 = vld [vmem:[%s3 + $0x90] sm:$0xff]
      %v555 = vld [vmem:[%s3 + $0x98] sm:$0xff]
      %v556 = vld [vmem:[%s3 + $0xa0] sm:$0xff]
      %v557 = vld [vmem:[%s3 + $0xa8] sm:$0xff]
      %v558 = vld [vmem:[%s3 + $0xb0] sm:$0xff]
      %v559 = vld [vmem:[%s3 + $0xb8] sm:$0xff]
      %v560 = vld [vmem:[%s3 + $0xc0] sm:$0xff]
      %v561 = vld [vmem:[%s3 + $0xc8] sm:$0xff]
      %v562 = vld [vmem:[%s3 + $0xd0] sm:$0xff]
      %v563 = vld [vmem:[%s3 + $0xd8] sm:$0xff]
      %v564 = vld [vmem:[%s3 + $0xe0] sm:$0xff]
      %v565 = vld [vmem:[%s3 + $0xe8] sm:$0xff]
      %v566 = vld [vmem:[%s3 + $0xf0] sm:$0xff]
      %v567 = vld [vmem:[%s3 + $0xf8] sm:$0xff]
      %v568 = vld [vmem:[%s3 + $0x100] sm:$0xff]
      %v569 = vld [vmem:[%s3 + $0x108] sm:$0xff]
      %v570 = vld [vmem:[%s3 + $0x110] sm:$0xff]
      %v571 = vld [vmem:[%s3 + $0x118] sm:$0xff]
      %v572 = vld [vmem:[%s3 + $0x120] sm:$0xff]
      %v573 = vld [vmem:[%s3 + $0x128] sm:$0xff]
      %v574 = vld [vmem:[%s3 + $0x130] sm:$0xff]
      %v575 = vld [vmem:[%s3 + $0x138] sm:$0xff]
      %v576 = vld [vmem:[%s3 + $0x140] sm:$0xff]
      %v577 = vld [vmem:[%s3 + $0x148] sm:$0xff]
      %v578 = vld [vmem:[%s3 + $0x150] sm:$0xff]
      %v579 = vld [vmem:[%s3 + $0x158] sm:$0xff]
      %v580 = vld [vmem:[%s3 + $0x160] sm:$0xff]
      %v581 = vld [vmem:[%s3 + $0x168] sm:$0xff]
      %v582 = vld [vmem:[%s3 + $0x170] sm:$0xff]
      %v583 = vld [vmem:[%s3 + $0x178] sm:$0xff]
      %v584 = vld [vmem:[%s3 + $0x180] sm:$0xff]
      %v585 = vld [vmem:[%s3 + $0x188] sm:$0xff]
      %v586 = vld [vmem:[%s3 + $0x190] sm:$0xff]
      %v587 = vld [vmem:[%s3 + $0x198] sm:$0xff]
      %v588 = vld [vmem:[%s3 + $0x1a0] sm:$0xff]
      %v589 = vld [vmem:[%s3 + $0x1a8] sm:$0xff]
      %v590 = vld [vmem:[%s3 + $0x1b0] sm:$0xff]
      %v591 = vld [vmem:[%s3 + $0x1b8] sm:$0xff]
      %v592 = vld [vmem:[%s3 + $0x1c0] sm:$0xff]
      %v593 = vld [vmem:[%s3 + $0x1c8] sm:$0xff]
      %v594 = vld [vmem:[%s3 + $0x1d0] sm:$0xff]
      %v595 = vld [vmem:[%s3 + $0x1d8] sm:$0xff]
      %v596 = vld [vmem:[%s3 + $0x1e0] sm:$0xff]
      %v597 = vld [vmem:[%s3 + $0x1e8] sm:$0xff]
      %v598 = vld [vmem:[%s3 + $0x1f0] sm:$0xff]
      %v599 = vld [vmem:[%s3 + $0x1f8] sm:$0xff]
      %v600 = vld [vmem:[%s3 + $0x200] sm:$0xff]
      %v601 = vld [vmem:[%s3 + $0x208] sm:$0xff]
      %v602 = vld [vmem:[%s3 + $0x210] sm:$0xff]
      %v603 = vld [vmem:[%s3 + $0x218] sm:$0xff]
      %v604 = vld [vmem:[%s3 + $0x220] sm:$0xff]
      %v605 = vld [vmem:[%s3 + $0x228] sm:$0xff]
      %v606 = vld [vmem:[%s3 + $0x230] sm:$0xff]
      %v607 = vld [vmem:[%s3 + $0x238] sm:$0xff]
      %v608 = vld [vmem:[%s3 + $0x240] sm:$0xff]
      %v609 = vld [vmem:[%s3 + $0x248] sm:$0xff]
      %v610 = vld [vmem:[%s3 + $0x250] sm:$0xff]
      %v611 = vld [vmem:[%s3 + $0x258] sm:$0xff]
      %v612 = vld [vmem:[%s3 + $0x260] sm:$0xff]
      %v613 = vld [vmem:[%s3 + $0x268] sm:$0xff]
      %v614 = vld [vmem:[%s3 + $0x270] sm:$0xff]
      %v615 = vld [vmem:[%s3 + $0x278] sm:$0xff]
      %v616 = vld [vmem:[%s3 + $0x280] sm:$0xff]
      %v617 = vld [vmem:[%s3 + $0x288] sm:$0xff]
      %v618 = vld [vmem:[%s3 + $0x290] sm:$0xff]
      %v619 = vld [vmem:[%s3 + $0x298] sm:$0xff]
      %v620 = vld [vmem:[%s3 + $0x2a0] sm:$0xff]
      %v621 = vld [vmem:[%s3 + $0x2a8] sm:$0xff]
      %v622 = vld [vmem:[%s3 + $0x2b0] sm:$0xff]
      %v623 = vld [vmem:[%s3 + $0x2b8] sm:$0xff]
      %v624 = vld [vmem:[%s3 + $0x2c0] sm:$0xff]
      %v625 = vld [vmem:[%s3 + $0x2c8] sm:$0xff]
      %v626 = vld [vmem:[%s3 + $0x2d0] sm:$0xff]
      %v627 = vld [vmem:[%s3 + $0x2d8] sm:$0xff]
      %v628 = vld [vmem:[%s3 + $0x2e0] sm:$0xff]
      %v629 = vld [vmem:[%s3 + $0x2e8] sm:$0xff]
      %v630 = vld [vmem:[%s3 + $0x2f0] sm:$0xff]
      %v631 = vld [vmem:[%s3 + $0x2f8] sm:$0xff]
      %v632 = vld [vmem:[%s3 + $0x300] sm:$0xff]
      %v633 = vld [vmem:[%s3 + $0x308] sm:$0xff]
      %v634 = vld [vmem:[%s3 + $0x310] sm:$0xff]
      %v635 = vld [vmem:[%s3 + $0x318] sm:$0xff]
      %v636 = vld [vmem:[%s3 + $0x320] sm:$0xff]
      %v637 = vld [vmem:[%s3 + $0x328] sm:$0xff]
      %v638 = vld [vmem:[%s3 + $0x330] sm:$0xff]
      %v639 = vld [vmem:[%s3 + $0x338] sm:$0xff]
      %v640 = vld [vmem:[%s3 + $0x340] sm:$0xff]
      %v641 = vld [vmem:[%s3 + $0x348] sm:$0xff]
      %v642 = vld [vmem:[%s3 + $0x350] sm:$0xff]
      %v643 = vld [vmem:[%s3 + $0x358] sm:$0xff]
      %v644 = vld [vmem:[%s3 + $0x360] sm:$0xff]
      %v645 = vld [vmem:[%s3 + $0x368] sm:$0xff]
      %v646 = vld [vmem:[%s3 + $0x370] sm:$0xff]
      %v647 = vld [vmem:[%s3 + $0x378] sm:$0xff]
      %v648 = vld [vmem:[%s3 + $0x380] sm:$0xff]
      %v649 = vld [vmem:[%s3 + $0x388] sm:$0xff]
      %v650 = vld [vmem:[%s3 + $0x390] sm:$0xff]
      %v651 = vld [vmem:[%s3 + $0x398] sm:$0xff]
      %v652 = vld [vmem:[%s3 + $0x3a0] sm:$0xff]
      %v653 = vld [vmem:[%s3 + $0x3a8] sm:$0xff]
      %v654 = vld [vmem:[%s3 + $0x3b0] sm:$0xff]
      %v655 = vld [vmem:[%s3 + $0x3b8] sm:$0xff]
      %v656 = vld [vmem:[%s3 + $0x3c0] sm:$0xff]
      %v657 = vld [vmem:[%s3 + $0x3c8] sm:$0xff]
      %v658 = vld [vmem:[%s3 + $0x3d0] sm:$0xff]
      %v659 = vld [vmem:[%s3 + $0x3d8] sm:$0xff]
      %v660 = vld [vmem:[%s3 + $0x3e0] sm:$0xff]
      %v661 = vld [vmem:[%s3 + $0x3e8] sm:$0xff]
      %v662 = vld [vmem:[%s3 + $0x3f0] sm:$0xff]
      %v663 = vld [vmem:[%s3 + $0x3f8] sm:$0xff]
      %v664 = vld [vmem:[%s3 + $0x400] sm:$0xff]
      %v665 = vld [vmem:[%s3 + $0x408] sm:$0xff]
      %v666 = vld [vmem:[%s3 + $0x410] sm:$0xff]
      %v667 = vld [vmem:[%s3 + $0x418] sm:$0xff]
      %v668 = vld [vmem:[%s3 + $0x420] sm:$0xff]
      %v669 = vld [vmem:[%s3 + $0x428] sm:$0xff]
      %v670 = vld [vmem:[%s3 + $0x430] sm:$0xff]
      %v671 = vld [vmem:[%s3 + $0x438] sm:$0xff]
      %v672 = vld [vmem:[%s3 + $0x440] sm:$0xff]
      %v673 = vld [vmem:[%s3 + $0x448] sm:$0xff]
      %v674 = vld [vmem:[%s3 + $0x450] sm:$0xff]
      %v675 = vld [vmem:[%s3 + $0x458] sm:$0xff]
      %v676 = vld [vmem:[%s3 + $0x460] sm:$0xff]
      %v677 = vld [vmem:[%s3 + $0x468] sm:$0xff]
      %v678 = vld [vmem:[%s3 + $0x470] sm:$0xff]
      %v679 = vld [vmem:[%s3 + $0x478] sm:$0xff]
      %v680 = vld [vmem:[%s3 + $0x480] sm:$0xff]
      %v681 = vld [vmem:[%s3 + $0x488] sm:$0xff]
      %v682 = vld [vmem:[%s3 + $0x490] sm:$0xff]
      %v683 = vld [vmem:[%s3 + $0x498] sm:$0xff]
      %v684 = vld [vmem:[%s3 + $0x4a0] sm:$0xff]
      %v685 = vld [vmem:[%s3 + $0x4a8] sm:$0xff]
      %v686 = vld [vmem:[%s3 + $0x4b0] sm:$0xff]
      %v687 = vld [vmem:[%s3 + $0x4b8] sm:$0xff]
      %v688 = vld [vmem:[%s3 + $0x4c0] sm:$0xff]
      %v689 = vld [vmem:[%s3 + $0x4c8] sm:$0xff]
      %v690 = vld [vmem:[%s3 + $0x4d0] sm:$0xff]
      %v691 = vld [vmem:[%s3 + $0x4d8] sm:$0xff]
      %v692 = vld [vmem:[%s3 + $0x4e0] sm:$0xff]
      %v693 = vld [vmem:[%s3 + $0x4e8] sm:$0xff]
      %v694 = vld [vmem:[%s3 + $0x4f0] sm:$0xff]
      %v695 = vld [vmem:[%s3 + $0x4f8] sm:$0xff]
      %v696 = vld [vmem:[%s3 + $0x500] sm:$0xff]
      %v697 = vld [vmem:[%s3 + $0x508] sm:$0xff]
      %v698 = vld [vmem:[%s3 + $0x510] sm:$0xff]
      %v699 = vld [vmem:[%s3 + $0x518] sm:$0xff]
      %v700 = vld [vmem:[%s3 + $0x520] sm:$0xff]
      %v701 = vld [vmem:[%s3 + $0x528] sm:$0xff]
      %v702 = vld [vmem:[%s3 + $0x530] sm:$0xff]
      %v703 = vld [vmem:[%s3 + $0x538] sm:$0xff]
      %v704 = vld [vmem:[%s3 + $0x540] sm:$0xff]
      %v705 = vld [vmem:[%s3 + $0x548] sm:$0xff]
      %v706 = vld [vmem:[%s3 + $0x550] sm:$0xff]
      %v707 = vld [vmem:[%s3 + $0x558] sm:$0xff]
      %v708 = vld [vmem:[%s3 + $0x560] sm:$0xff]
      %v709 = vld [vmem:[%s3 + $0x568] sm:$0xff]
      %v710 = vld [vmem:[%s3 + $0x570] sm:$0xff]
      %v711 = vld [vmem:[%s3 + $0x578] sm:$0xff]
      %v712 = vld [vmem:[%s3 + $0x580] sm:$0xff]
      %v713 = vld [vmem:[%s3 + $0x588] sm:$0xff]
      %v714 = vld [vmem:[%s3 + $0x590] sm:$0xff]
      %v715 = vld [vmem:[%s3 + $0x598] sm:$0xff]
      %v716 = vld [vmem:[%s3 + $0x5a0] sm:$0xff]
      %v717 = vld [vmem:[%s3 + $0x5a8] sm:$0xff]
      %v718 = vld [vmem:[%s3 + $0x5b0] sm:$0xff]
      %v719 = vld [vmem:[%s3 + $0x5b8] sm:$0xff]
      %v720 = vld [vmem:[%s3 + $0x5c0] sm:$0xff]
      %v721 = vld [vmem:[%s3 + $0x5c8] sm:$0xff]
      %v722 = vld [vmem:[%s3 + $0x5d0] sm:$0xff]
      %v723 = vld [vmem:[%s3 + $0x5d8] sm:$0xff]
      %v724 = vld [vmem:[%s3 + $0x5e0] sm:$0x7]
      %v725 = vld [vmem:[%s3 + $0x5e8] sm:$0x7]
      %vm726 = vcmask 941056
      %v728 = vsel %vm726, %v535, 0
      %vm730 = vcmask 1042432
      %v732 = vsel %vm730, %v724, 0
      %v735 = vsel %vm730, %v725, 0
      %737 = vmatpush.msra.mxu0 %v566
      %738 = vmatpush.msra.mxu0 %v564
      %739 = vmatpush.msra.mxu0 %v562
      %740 = vmatpush.msra.mxu0 %v560
      %741 = vmatpush.msra.mxu0 %v558
      %742 = vmatpush.msra.mxu0 %v556
      %743 = vmatpush.msra.mxu0 %v554
      %744 = vmatpush.msra.mxu0 %v552
      %745 = vmatpush.msra.mxu0 %v550
      %746 = vmatpush.msra.mxu0 %v548
      %747 = vmatpush.msra.mxu0 %v546
      %748 = vmatpush.msra.mxu0 %v544
      %749 = vmatpush.msra.mxu0 %v542
      %750 = vmatpush.msra.mxu0 %v540
      %751 = vmatpush.msra.mxu0 %v538
      %752 = vmatpush.msra.mxu0 %v536
      %753 = vmatmul.f32.gmra.mxu0 %v530
      %v754 = vpop.f32.mrf.mxu0
      %v755 = vadd.f32 0.0, %v754
      %756 = vdwg.mxu0
      %757 = vmatpush.msra.mxu0 %v598
      %758 = vmatpush.msra.mxu0 %v596
      %759 = vmatpush.msra.mxu0 %v594
      %760 = vmatpush.msra.mxu0 %v592
      %761 = vmatpush.msra.mxu0 %v590
      %762 = vmatpush.msra.mxu0 %v588
      %763 = vmatpush.msra.mxu0 %v586
      %764 = vmatpush.msra.mxu0 %v584
      %765 = vmatpush.msra.mxu0 %v582
      %766 = vmatpush.msra.mxu0 %v580
      %767 = vmatpush.msra.mxu0 %v578
      %768 = vmatpush.msra.mxu0 %v576
      %769 = vmatpush.msra.mxu0 %v574
      %770 = vmatpush.msra.mxu0 %v572
      %771 = vmatpush.msra.mxu0 %v570
      %772 = vmatpush.msra.mxu0 %v568
      %773 = vmatmul.f32.gmra.mxu0 %v531
      %v774 = vpop.f32.mrf.mxu0
      %v775 = vadd.f32 %v755, %v774
      %776 = vdwg.mxu0
      %777 = vmatpush.msra.mxu0 %v630
      %778 = vmatpush.msra.mxu0 %v628
      %779 = vmatpush.msra.mxu0 %v626
      %780 = vmatpush.msra.mxu0 %v624
      %781 = vmatpush.msra.mxu0 %v622
      %782 = vmatpush.msra.mxu0 %v620
      %783 = vmatpush.msra.mxu0 %v618
      %784 = vmatpush.msra.mxu0 %v616
      %785 = vmatpush.msra.mxu0 %v614
      %786 = vmatpush.msra.mxu0 %v612
      %787 = vmatpush.msra.mxu0 %v610
      %788 = vmatpush.msra.mxu0 %v608
      %789 = vmatpush.msra.mxu0 %v606
      %790 = vmatpush.msra.mxu0 %v604
      %791 = vmatpush.msra.mxu0 %v602
      %792 = vmatpush.msra.mxu0 %v600
      %793 = vmatmul.f32.gmra.mxu0 %v532
      %v794 = vpop.f32.mrf.mxu0
      %v795 = vadd.f32 %v775, %v794
      %796 = vdwg.mxu0
      %797 = vmatpush.msra.mxu0 %v662
      %798 = vmatpush.msra.mxu0 %v660
      %799 = vmatpush.msra.mxu0 %v658
      %800 = vmatpush.msra.mxu0 %v656
      %801 = vmatpush.msra.mxu0 %v654
      %802 = vmatpush.msra.mxu0 %v652
      %803 = vmatpush.msra.mxu0 %v650
      %804 = vmatpush.msra.mxu0 %v648
      %805 = vmatpush.msra.mxu0 %v646
      %806 = vmatpush.msra.mxu0 %v644
      %807 = vmatpush.msra.mxu0 %v642
      %808 = vmatpush.msra.mxu0 %v640
      %809 = vmatpush.msra.mxu0 %v638
      %810 = vmatpush.msra.mxu0 %v636
      %811 = vmatpush.msra.mxu0 %v634
      %812 = vmatpush.msra.mxu0 %v632
      %813 = vmatmul.f32.gmra.mxu0 %v533
      %v814 = vpop.f32.mrf.mxu0
      %v815 = vadd.f32 %v795, %v814
      %816 = vdwg.mxu0
      %817 = vmatpush.msra.mxu0 %v694
      %818 = vmatpush.msra.mxu0 %v692
      %819 = vmatpush.msra.mxu0 %v690
      %820 = vmatpush.msra.mxu0 %v688
      %821 = vmatpush.msra.mxu0 %v686
      %822 = vmatpush.msra.mxu0 %v684
      %823 = vmatpush.msra.mxu0 %v682
      %824 = vmatpush.msra.mxu0 %v680
      %825 = vmatpush.msra.mxu0 %v678
      %826 = vmatpush.msra.mxu0 %v676
      %827 = vmatpush.msra.mxu0 %v674
      %828 = vmatpush.msra.mxu0 %v672
      %829 = vmatpush.msra.mxu0 %v670
      %830 = vmatpush.msra.mxu0 %v668
      %831 = vmatpush.msra.mxu0 %v666
      %832 = vmatpush.msra.mxu0 %v664
      %833 = vmatmul.f32.gmra.mxu0 %v534
      %v834 = vpop.f32.mrf.mxu0
      %v835 = vadd.f32 %v815, %v834
      %836 = vdwg.mxu0
      %837 = vmatpush.msra.mxu0 0.0
      %838 = vmatpush.msra.mxu0 %v732
      %839 = vmatpush.msra.mxu0 %v722
      %840 = vmatpush.msra.mxu0 %v720
      %841 = vmatpush.msra.mxu0 %v718
      %842 = vmatpush.msra.mxu0 %v716
      %843 = vmatpush.msra.mxu0 %v714
      %844 = vmatpush.msra.mxu0 %v712
      %845 = vmatpush.msra.mxu0 %v710
      %846 = vmatpush.msra.mxu0 %v708
      %847 = vmatpush.msra.mxu0 %v706
      %848 = vmatpush.msra.mxu0 %v704
      %849 = vmatpush.msra.mxu0 %v702
      %850 = vmatpush.msra.mxu0 %v700
      %851 = vmatpush.msra.mxu0 %v698
      %852 = vmatpush.msra.mxu0 %v696
      %853 = vmatmul.f32.gmra.mxu0 %v728
      %v854 = vpop.f32.mrf.mxu0
      %v855 = vadd.f32 %v835, %v854
      %856 = vdwg.mxu0
      %857 = vmatpush.msra.mxu0 %v567
      %858 = vmatpush.msra.mxu0 %v565
      %859 = vmatpush.msra.mxu0 %v563
      %860 = vmatpush.msra.mxu0 %v561
      %861 = vmatpush.msra.mxu0 %v559
      %862 = vmatpush.msra.mxu0 %v557
      %863 = vmatpush.msra.mxu0 %v555
      %864 = vmatpush.msra.mxu0 %v553
      %865 = vmatpush.msra.mxu0 %v551
      %866 = vmatpush.msra.mxu0 %v549
      %867 = vmatpush.msra.mxu0 %v547
      %868 = vmatpush.msra.mxu0 %v545
      %869 = vmatpush.msra.mxu0 %v543
      %870 = vmatpush.msra.mxu0 %v541
      %871 = vmatpush.msra.mxu0 %v539
      %872 = vmatpush.msra.mxu0 %v537
      %873 = vmatmul.f32.gmra.mxu0 %v530
      %v874 = vpop.f32.mrf.mxu0
      %v875 = vadd.f32 0.0, %v874
      %876 = vdwg.mxu0
      %877 = vmatpush.msra.mxu0 %v599
      %878 = vmatpush.msra.mxu0 %v597
      %879 = vmatpush.msra.mxu0 %v595
      %880 = vmatpush.msra.mxu0 %v593
      %881 = vmatpush.msra.mxu0 %v591
      %882 = vmatpush.msra.mxu0 %v589
      %883 = vmatpush.msra.mxu0 %v587
      %884 = vmatpush.msra.mxu0 %v585
      %885 = vmatpush.msra.mxu0 %v583
      %886 = vmatpush.msra.mxu0 %v581
      %887 = vmatpush.msra.mxu0 %v579
      %888 = vmatpush.msra.mxu0 %v577
      %889 = vmatpush.msra.mxu0 %v575
      %890 = vmatpush.msra.mxu0 %v573
      %891 = vmatpush.msra.mxu0 %v571
      %892 = vmatpush.msra.mxu0 %v569
      %893 = vmatmul.f32.gmra.mxu0 %v531
      %v894 = vpop.f32.mrf.mxu0
      %v895 = vadd.f32 %v875, %v894
      %896 = vdwg.mxu0
      %897 = vmatpush.msra.mxu0 %v631
      %898 = vmatpush.msra.mxu0 %v629
      %899 = vmatpush.msra.mxu0 %v627
      %900 = vmatpush.msra.mxu0 %v625
      %901 = vmatpush.msra.mxu0 %v623
      %902 = vmatpush.msra.mxu0 %v621
      %903 = vmatpush.msra.mxu0 %v619
      %904 = vmatpush.msra.mxu0 %v617
      %905 = vmatpush.msra.mxu0 %v615
      %906 = vmatpush.msra.mxu0 %v613
      %907 = vmatpush.msra.mxu0 %v611
      %908 = vmatpush.msra.mxu0 %v609
      %909 = vmatpush.msra.mxu0 %v607
      %910 = vmatpush.msra.mxu0 %v605
      %911 = vmatpush.msra.mxu0 %v603
      %912 = vmatpush.msra.mxu0 %v601
      %913 = vmatmul.f32.gmra.mxu0 %v532
      %v914 = vpop.f32.mrf.mxu0
      %v915 = vadd.f32 %v895, %v914
      %916 = vdwg.mxu0
      %917 = vmatpush.msra.mxu0 %v663
      %918 = vmatpush.msra.mxu0 %v661
      %919 = vmatpush.msra.mxu0 %v659
      %920 = vmatpush.msra.mxu0 %v657
      %921 = vmatpush.msra.mxu0 %v655
      %922 = vmatpush.msra.mxu0 %v653
      %923 = vmatpush.msra.mxu0 %v651
      %924 = vmatpush.msra.mxu0 %v649
      %925 = vmatpush.msra.mxu0 %v647
      %926 = vmatpush.msra.mxu0 %v645
      %927 = vmatpush.msra.mxu0 %v643
      %928 = vmatpush.msra.mxu0 %v641
      %929 = vmatpush.msra.mxu0 %v639
      %930 = vmatpush.msra.mxu0 %v637
      %931 = vmatpush.msra.mxu0 %v635
      %932 = vmatpush.msra.mxu0 %v633
      %933 = vmatmul.f32.gmra.mxu0 %v533
      %v934 = vpop.f32.mrf.mxu0
      %v935 = vadd.f32 %v915, %v934
      %936 = vdwg.mxu0
      %937 = vmatpush.msra.mxu0 %v695
      %938 = vmatpush.msra.mxu0 %v693
      %939 = vmatpush.msra.mxu0 %v691
      %940 = vmatpush.msra.mxu0 %v689
      %941 = vmatpush.msra.mxu0 %v687
      %942 = vmatpush.msra.mxu0 %v685
      %943 = vmatpush.msra.mxu0 %v683
      %944 = vmatpush.msra.mxu0 %v681
      %945 = vmatpush.msra.mxu0 %v679
      %946 = vmatpush.msra.mxu0 %v677
      %947 = vmatpush.msra.mxu0 %v675
      %948 = vmatpush.msra.mxu0 %v673
      %949 = vmatpush.msra.mxu0 %v671
      %950 = vmatpush.msra.mxu0 %v669
      %951 = vmatpush.msra.mxu0 %v667
      %952 = vmatpush.msra.mxu0 %v665
      %953 = vmatmul.f32.gmra.mxu0 %v534
      %v954 = vpop.f32.mrf.mxu0
      %v955 = vadd.f32 %v935, %v954
      %956 = vdwg.mxu0
      %957 = vmatpush.msra.mxu0 0.0
      %958 = vmatpush.msra.mxu0 %v735
      %959 = vmatpush.msra.mxu0 %v723
      %960 = vmatpush.msra.mxu0 %v721
      %961 = vmatpush.msra.mxu0 %v719
      %962 = vmatpush.msra.mxu0 %v717
      %963 = vmatpush.msra.mxu0 %v715
      %964 = vmatpush.msra.mxu0 %v713
      %965 = vmatpush.msra.mxu0 %v711
      %966 = vmatpush.msra.mxu0 %v709
      %967 = vmatpush.msra.mxu0 %v707
      %968 = vmatpush.msra.mxu0 %v705
      %969 = vmatpush.msra.mxu0 %v703
      %970 = vmatpush.msra.mxu0 %v701
      %971 = vmatpush.msra.mxu0 %v699
      %972 = vmatpush.msra.mxu0 %v697
      %973 = vmatmul.f32.gmra.mxu0 %v728
      %v974 = vpop.f32.mrf.mxu0
      %v975 = vadd.f32 %v955, %v974
      %976 = vdwg.mxu0
      %977 = vst [vmem:[%s237] sm:$0x3f] %v855
      %vm978 = vcmask 553984
      %979 = vst.msk [vmem:[%s237 + $0x8] sm:$0x3f] %vm978, %v975
      %p980 = scmp.lt.s32.totalorder %s17, 1
      %s981 = scalar_select %p980, %s17, 1
      %s982 = smul.addr %s981, 7
      %s983 = smul.addr %s982, 8
      %s984 = scalar_lea.vmem %s4, %s983
      %p985 = scmp.lt.s32.totalorder %s17, 1
      %s986 = scalar_select %p985, %s17, 1
      %s987 = smul.addr %s986, 2
      %s988 = smul.addr %s987, 8
      %s989 = scalar_lea.vmem %s5, %s988
      // Predicated region
      $region37: #{lenet5_forward.3} parent=35 // pred_check
        %p990 = pneg %p124
      $region38: #{lenet5_forward.3} parent=35 // pred_check_branch
        %992 = sbr.rel (%p990) target = $region40
      $region39: #{lenet5_forward.3} parent=35 // pred_region
        _
      $region40: #{lenet5_forward.3} parent=35 // pred_fallthru
        _
      // Predicated region
      $region41: #{lenet5_forward.3} parent=35 // pred_check
        %p993 = pneg %p150
      $region42: #{lenet5_forward.3} parent=35 // pred_check_branch
        %995 = sbr.rel (%p993) target = $region44
      $region43: #{lenet5_forward.3} parent=35 // pred_region
        _
      $region44: #{lenet5_forward.3} parent=35 // pred_fallthru
        _
    $region36: #{lenet5_forward.3} parent=5 // pred_fallthru
      _
    %p996 = scmp.le.s32.totalorder 2, %s12
    // Predicated region
    $region45: #{lenet5_forward.3} parent=5 // pred_check
      %p997 = pneg %p996
    $region46: #{lenet5_forward.3} parent=5 // pred_check_branch
      %999 = sbr.rel (%p997) target = $region48
    $region47: #{lenet5_forward.3} parent=5 // pred_region
      %s1000 = ssub.s32 %s12, 2
      // Predicated region
      $region49: #{lenet5_forward.3} parent=47 // pred_check
        %p1001 = pneg %p130
      $region50: #{lenet5_forward.3} parent=47 // pred_check_branch
        %1003 = sbr.rel (%p1001) target = $region52
      $region51: #{lenet5_forward.3} parent=47 // pred_region
        %p1004 = scmp.lt.s32.totalorder %s18, 1
        %s1005 = scalar_select %p1004, %s18, 1
        %s1006 = smul.addr %s1005, 7
        %s1007 = smul.addr %s1006, 8
        %s1008 = scalar_lea.vmem %s4, %s1007
      $region52: #{lenet5_forward.3} parent=47 // pred_fallthru
        _
      // Predicated region
      $region53: #{lenet5_forward.3} parent=47 // pred_check
        %p1009 = pneg %p156
      $region54: #{lenet5_forward.3} parent=47 // pred_check_branch
        %1011 = sbr.rel (%p1009) target = $region56
      $region55: #{lenet5_forward.3} parent=47 // pred_region
        %p1012 = scmp.lt.s32.totalorder %s18, 1
        %s1013 = scalar_select %p1012, %s18, 1
        %s1014 = smul.addr %s1013, 2
        %s1015 = smul.addr %s1014, 8
        %s1016 = scalar_lea.vmem %s5, %s1015
      $region56: #{lenet5_forward.3} parent=47 // pred_fallthru
        _
    $region48: #{lenet5_forward.3} parent=5 // pred_fallthru
      _
  $region6: #{lenet5_forward.3} parent=0 // loop_footer
    %s16 = sadd.s32 1, %s12
  $region7: #{lenet5_forward.3} parent=0 // loop_footer_branch
    %11 = sbr.rel target = $region3
  $region8: #{lenet5_forward.3} parent=0 // loop_exit
    _

// kernel: lenet5_forward.4
$region0: #{lenet5_forward.4}
  #allocation0 [shape = 'u32[]', space=smem, size = 0x4, offset = 0x4, fixed_abs, tag = 'smem constant byte address 0x4 - core index']
  #allocation1 [shape = 'u32[72,128]{1,0:T(1,128)}', space=vmem, size = 0x9000, scoped, tag = 'internal scratch']
  %s0 = inlined_call_operand.vmem [shape: f32[2,150,100], index: 0, kind: input, shape index: {}]
  %s1 = inlined_call_operand.vmem [shape: f32[16,150], index: 1, kind: input, shape index: {}]
  %s2 = inlined_call_operand.vmem [shape: f32[16,1], index: 2, kind: input, shape index: {}]
  %s3 = inlined_call_operand.vmem [shape: f32[89,25], index: 3, kind: input, shape index: {}]
  %s4 = inlined_call_operand.vmem [shape: f32[2,16,100], index: 4, kind: output, shape index: {0}]
  %s5 = inlined_call_operand.vmem [shape: f32[2,16,25], index: 5, kind: output, shape index: {1}]
  %6 = xla_tuple %s4, %s5
  %s7 = sld [smem:[#allocation0]]
  $region57: #{lenet5_forward.4} parent=0
    _
  %s9 = ssub.s32 1, %s7
  %s10 = scalar_select 0, %s9, %s7
  loop: start=0, step=1, limit=4
  $region2: #{lenet5_forward.4} parent=0 // loop_pre_header
    _
  $region3: #{lenet5_forward.4} parent=0 // loop_header
    %s12 = sphi 0, %s16
    %p13 = scmp.ge.s32.totalorder %s12, 4
    %s22 = sphi 0, %s24
    %s25 = sphi 0, %s22
    %s26 = sphi 0, %s25
    %s42 = sphi 0, %s26
    %s46 = sphi 0, %s46
    %s48 = sphi 0, %s46
    %s49 = sphi 0, %s48
    %s63 = sphi 0, %s49
    %s67 = sphi 0, %s67
    %s69 = sphi 0, %s67
    %s70 = sphi 0, %s69
    %s84 = sphi 0, %s70
    %s88 = sphi 0, %s88
    %s90 = sphi 0, %s88
    %s91 = sphi 0, %s90
    %s105 = sphi 0, %s91
    %s111 = sphi 0, %s113
    %s114 = sphi 0, %s111
    %s115 = sphi 0, %s114
    %s131 = sphi 0, %s115
    %s137 = sphi 0, %s139
    %s140 = sphi 0, %s137
    %s141 = sphi 0, %s140
    %s157 = sphi 0, %s141
  $region4: #{lenet5_forward.4} parent=0 // loop_header_branch
    %15 = sbr.rel (%p13) target = $region8
  $region5: #{lenet5_forward.4} parent=0 // loop_body
    %s17 = ssub.s32 %s12, 1
    %s18 = ssub.s32 %s12, 2
    %s19 = sadd.s32 %s12, 1
    %s20 = ssub.s32 %s12, %s19
    %p21 = scmp.eq.s32.totalorder %s20, 0
    %s23 = sadd.s32 %s22, 1
    %s24 = scalar_select %p21, %s22, %s23
    %p27 = pneg %p21
    %p28 = scmp.eq.s32.totalorder %s12, 1
    %p29 = por %p27, %p28
    %p30 = scmp.ne.s32.totalorder %s22, %s25
    %p31 = scmp.eq.s32.totalorder %s12, 0
    %p32 = por %p30, %p31
    %p33 = scmp.ne.s32.totalorder %s22, %s25
    %p34 = scmp.eq.s32.totalorder %s17, 1
    %p35 = por %p33, %p34
    %p36 = scmp.ne.s32.totalorder %s25, %s26
    %p37 = scmp.eq.s32.totalorder %s17, 0
    %p38 = por %p36, %p37
    %p39 = scmp.ne.s32.totalorder %s25, %s26
    %p40 = scmp.eq.s32.totalorder %s18, 1
    %p41 = por %p39, %p40
    %p43 = scmp.ne.s32.totalorder %s26, %s42
    %p44 = scmp.eq.s32.totalorder %s18, 0
    %p45 = por %p43, %p44
    %s47 = sadd.s32 %s46, 1
    %p50 = scmp.eq.s32.totalorder %s12, 1
    %p51 = scmp.ne.s32.totalorder %s46, %s48
    %p52 = scmp.eq.s32.totalorder %s12, 0
    %p53 = por %p51, %p52
    %p54 = scmp.ne.s32.totalorder %s46, %s48
    %p55 = scmp.eq.s32.totalorder %s17, 1
    %p56 = por %p54, %p55
    %p57 = scmp.ne.s32.totalorder %s48, %s49
    %p58 = scmp.eq.s32.totalorder %s17, 0
    %p59 = por %p57, %p58
    %p60 = scmp.ne.s32.totalorder %s48, %s49
    %p61 = scmp.eq.s32.totalorder %s18, 1
    %p62 = por %p60, %p61
    %p64 = scmp.ne.s32.totalorder %s49, %s63
    %p65 = scmp.eq.s32.totalorder %s18, 0
    %p66 = por %p64, %p65
    %s68 = sadd.s32 %s67, 1
    %p71 = scmp.eq.s32.totalorder %s12, 1
    %p72 = scmp.ne.s32.totalorder %s67, %s69
    %p73 = scmp.eq.s32.totalorder %s12, 0
    %p74 = por %p72, %p73
    %p75 = scmp.ne.s32.totalorder %s67, %s69
    %p76 = scmp.eq.s32.totalorder %s17, 1
    %p77 = por %p75, %p76
    %p78 = scmp.ne.s32.totalorder %s69, %s70
    %p79 = scmp.eq.s32.totalorder %s17, 0
    %p80 = por %p78, %p79
    %p81 = scmp.ne.s32.totalorder %s69, %s70
    %p82 = scmp.eq.s32.totalorder %s18, 1
    %p83 = por %p81, %p82
    %p85 = scmp.ne.s32.totalorder %s70, %s84
    %p86 = scmp.eq.s32.totalorder %s18, 0
    %p87 = por %p85, %p86
    %s89 = sadd.s32 %s88, 1
    %p92 = scmp.eq.s32.totalorder %s12, 1
    %p93 = scmp.ne.s32.totalorder %s88, %s90
    %p94 = scmp.eq.s32.totalorder %s12, 0
    %p95 = por %p93, %p94
    %p96 = scmp.ne.s32.totalorder %s88, %s90
    %p97 = scmp.eq.s32.totalorder %s17, 1
    %p98 = por %p96, %p97
    %p99 = scmp.ne.s32.totalorder %s90, %s91
    %p100 = scmp.eq.s32.totalorder %s17, 0
    %p101 = por %p99, %p100
    %p102 = scmp.ne.s32.totalorder %s90, %s91
    %p103 = scmp.eq.s32.totalorder %s18, 1
    %p104 = por %p102, %p103
    %p106 = scmp.ne.s32.totalorder %s91, %s105
    %p107 = scmp.eq.s32.totalorder %s18, 0
    %p108 = por %p106, %p107
    %s109 = ssub.s32 %s12, %s19
    %p110 = scmp.eq.s32.totalorder %s109, 0
    %s112 = sadd.s32 %s111, 1
    %s113 = scalar_select %p110, %s111, %s112
    %p116 = pneg %p110
    %p117 = scmp.eq.s32.totalorder %s12, 1
    %p118 = por %p116, %p117
    %p119 = scmp.ne.s32.totalorder %s111, %s114
    %p120 = scmp.eq.s32.totalorder %s12, 0
    %p121 = por %p119, %p120
    %p122 = scmp.ne.s32.totalorder %s111, %s114
    %p123 = scmp.eq.s32.totalorder %s17, 1
    %p124 = por %p122, %p123
    %p125 = scmp.ne.s32.totalorder %s114, %s115
    %p126 = scmp.eq.s32.totalorder %s17, 0
    %p127 = por %p125, %p126
    %p128 = scmp.ne.s32.totalorder %s114, %s115
    %p129 = scmp.eq.s32.totalorder %s18, 1
    %p130 = por %p128, %p129
    %p132 = scmp.ne.s32.totalorder %s115, %s131
    %p133 = scmp.eq.s32.totalorder %s18, 0
    %p134 = por %p132, %p133
    %s135 = ssub.s32 %s12, %s19
    %p136 = scmp.eq.s32.totalorder %s135, 0
    %s138 = sadd.s32 %s137, 1
    %s139 = scalar_select %p136, %s137, %s138
    %p142 = pneg %p136
    %p143 = scmp.eq.s32.totalorder %s12, 1
    %p144 = por %p142, %p143
    %p145 = scmp.ne.s32.totalorder %s137, %s140
    %p146 = scmp.eq.s32.totalorder %s12, 0
    %p147 = por %p145, %p146
    %p148 = scmp.ne.s32.totalorder %s137, %s140
    %p149 = scmp.eq.s32.totalorder %s17, 1
    %p150 = por %p148, %p149
    %p151 = scmp.ne.s32.totalorder %s140, %s141
    %p152 = scmp.eq.s32.totalorder %s17, 0
    %p153 = por %p151, %p152
    %p154 = scmp.ne.s32.totalorder %s140, %s141
    %p155 = scmp.eq.s32.totalorder %s18, 1
    %p156 = por %p154, %p155
    %p158 = scmp.ne.s32.totalorder %s141, %s157
    %p159 = scmp.eq.s32.totalorder %s18, 0
    %p160 = por %p158, %p159
    %p161 = scmp.le.s32.totalorder 1, %s12
    %p162 = scmp.lt.s32.totalorder %s12, 3
    %p163 = pnand %p161, %p162
    %p164 = pneg %p163
    // Predicated region
    $region9: #{lenet5_forward.4} parent=5 // pred_check
      _
    $region10: #{lenet5_forward.4} parent=5 // pred_check_branch
      %166 = sbr.rel (%p163) target = $region12
    $region11: #{lenet5_forward.4} parent=5 // pred_region
      %s167 = ssub.s32 %s12, 1
      // Predicated region
      $region13: #{lenet5_forward.4} parent=11 // pred_check
        %p168 = pneg %p59
      $region14: #{lenet5_forward.4} parent=11 // pred_check_branch
        %170 = sbr.rel (%p168) target = $region16
      $region15: #{lenet5_forward.4} parent=11 // pred_region
        _
      $region16: #{lenet5_forward.4} parent=11 // pred_fallthru
        _
      // Predicated region
      $region17: #{lenet5_forward.4} parent=11 // pred_check
        %p171 = pneg %p80
      $region18: #{lenet5_forward.4} parent=11 // pred_check_branch
        %173 = sbr.rel (%p171) target = $region20
      $region19: #{lenet5_forward.4} parent=11 // pred_region
        _
      $region20: #{lenet5_forward.4} parent=11 // pred_fallthru
        _
      // Predicated region
      $region21: #{lenet5_forward.4} parent=11 // pred_check
        %p174 = pneg %p101
      $region22: #{lenet5_forward.4} parent=11 // pred_check_branch
        %176 = sbr.rel (%p174) target = $region24
      $region23: #{lenet5_forward.4} parent=11 // pred_region
        _
      $region24: #{lenet5_forward.4} parent=11 // pred_fallthru
        _
    $region12: #{lenet5_forward.4} parent=5 // pred_fallthru
      _
    %p177 = scmp.lt.s32.totalorder %s12, 2
    // Predicated region
    $region25: #{lenet5_forward.4} parent=5 // pred_check
      %p178 = pneg %p177
    $region26: #{lenet5_forward.4} parent=5 // pred_check_branch
      %180 = sbr.rel (%p178) target = $region28
    $region27: #{lenet5_forward.4} parent=5 // pred_region
      // Predicated region
      $region29: #{lenet5_forward.4} parent=27 // pred_check
        %p181 = pneg %p32
      $region30: #{lenet5_forward.4} parent=27 // pred_check_branch
        %183 = sbr.rel (%p181) target = $region32
      $region31: #{lenet5_forward.4} parent=27 // pred_region
        %p184 = scmp.lt.s32.totalorder %s12, 1
        %s185 = scalar_select %p184, %s12, 1
        %s186 = smul.addr %s185, 19
        %s187 = smul.addr %s186, 8
        %s188 = scalar_lea.vmem %s0, %s187
      $region32: #{lenet5_forward.4} parent=27 // pred_fallthru
        _
    $region28: #{lenet5_forward.4} parent=5 // pred_fallthru
      _
    %p189 = scmp.le.s32.totalorder 1, %s12
    %p190 = scmp.lt.s32.totalorder %s12, 3
    %p191 = pnand %p189, %p190
    %p192 = pneg %p191
    // Predicated region
    $region33: #{lenet5_forward.4} parent=5 // pred_check
      _
    $region34: #{lenet5_forward.4} parent=5 // pred_check_branch
      %194 = sbr.rel (%p191) target = $region36
    $region35: #{lenet5_forward.4} parent=5 // pred_region
      %s195 = ssub.s32 %s12, 1
      %p196 = scmp.lt.s32.totalorder %s17, 1
      %s197 = scalar_select %p196, %s17, 1
      %s198 = smul.addr %s197, 19
      %s199 = smul.addr %s198, 8
      %s200 = scalar_lea.vmem %s0, %s199
      %p201 = pneg %p38
      %p202 = pneg %p35
      %p203 = pneg %p59
      %p204 = pneg %p56
      %p205 = pneg %p80
      %p206 = pneg %p77
      %p207 = pneg %p101
      %p208 = pneg %p98
      %p209 = pneg %p127
      %p210 = pneg %p124
      %p211 = scmp.lt.s32.totalorder %s17, 1
      %s212 = scalar_select %p211, %s17, 1
      %s213 = smul.addr %s212, 2
      %s214 = smul.addr %s213, 8
      %s215 = scalar_lea.vmem %s4, %s214
      %p216 = pneg %p153
      %p217 = pneg %p150
      %p218 = scmp.lt.s32.totalorder %s17, 1
      %s219 = scalar_select %p218, %s17, 1
      %s220 = smul.addr %s219, 2
      %s221 = smul.addr %s220, 8
      %s222 = scalar_lea.vmem %s5, %s221
      %p223 = scmp.lt.s32.totalorder %s17, 1
      %s224 = scalar_select %p223, %s17, 1
      %s225 = smul.addr %s224, 19
      %s226 = smul.addr %s225, 8
      %s227 = scalar_lea.vmem %s0, %s226
      %p228 = scmp.lt.s32.totalorder %s17, 1
      %s229 = scalar_select %p228, %s17, 1
      %s230 = smul.addr %s229, 2
      %s231 = smul.addr %s230, 8
      %s232 = scalar_lea.vmem %s4, %s231
      %p233 = scmp.lt.s32.totalorder %s17, 1
      %s234 = scalar_select %p233, %s17, 1
      %s235 = smul.addr %s234, 2
      %s236 = smul.addr %s235, 8
      %s237 = scalar_lea.vmem %s5, %s236
      %v238 = vld [vmem:[%s227] sm:$0xff]
      %v239 = vld [vmem:[%s227 + $0x8] sm:$0xff]
      %v240 = vld [vmem:[%s227 + $0x10] sm:$0xff]
      %v241 = vld [vmem:[%s227 + $0x18] sm:$0xff]
      %v242 = vld [vmem:[%s227 + $0x20] sm:$0xff]
      %v243 = vld [vmem:[%s227 + $0x28] sm:$0xff]
      %v244 = vld [vmem:[%s227 + $0x30] sm:$0xff]
      %v245 = vld [vmem:[%s227 + $0x38] sm:$0xff]
      %v246 = vld [vmem:[%s227 + $0x40] sm:$0xff]
      %v247 = vld [vmem:[%s227 + $0x48] sm:$0xff]
      %v248 = vld [vmem:[%s227 + $0x50] sm:$0xff]
      %v249 = vld [vmem:[%s227 + $0x58] sm:$0xff]
      %v250 = vld [vmem:[%s227 + $0x60] sm:$0xff]
      %v251 = vld [vmem:[%s227 + $0x68] sm:$0xff]
      %v252 = vld [vmem:[%s227 + $0x70] sm:$0xff]
      %v253 = vld [vmem:[%s227 + $0x78] sm:$0xff]
      %v254 = vld [vmem:[%s227 + $0x80] sm:$0xff]
      %v255 = vld [vmem:[%s227 + $0x88] sm:$0xff]
      %v256 = vld [vmem:[%s227 + $0x90] sm:$0x3f]
      %v257 = vld [vmem:[%s1] sm:$0xff]
      %v258 = vld [vmem:[%s1 + $0x8] sm:$0xff]
      %v259 = vld [vmem:[%s1 + $0x10] sm:$0xff]
      %v260 = vld [vmem:[%s1 + $0x18] sm:$0xff]
      %v261 = vld [vmem:[%s2] sm:$0xff]
      %v262 = vld [vmem:[%s2 + $0x8] sm:$0xff]
      %264 = vset.pattern.permute.xlu0 0
      %265 = vperm.xlu0 %264, %v261
      %v266 = vpop.permute.xlu0 %265
      %269 = vset.pattern.permute.xlu0 0
      %270 = vperm.xlu0 %269, %v262
      %v271 = vpop.permute.xlu0 %270
      %vm273 = vcmask 179200
      %v275 = vsel %vm273, %v258, 0
      %v278 = vsel %vm273, %v260, 0
      %vm280 = vcmask 1045504
      %v282 = vsel %vm280, %v256, 0
      %284 = vmatpush.msra.mxu0 %v253
      %285 = vmatpush.msra.mxu0 %v252
      %286 = vmatpush.msra.mxu0 %v251
      %287 = vmatpush.msra.mxu0 %v250
      %288 = vmatpush.msra.mxu0 %v249
      %289 = vmatpush.msra.mxu0 %v248
      %290 = vmatpush.msra.mxu0 %v247
      %291 = vmatpush.msra.mxu0 %v246
      %292 = vmatpush.msra.mxu0 %v245
      %293 = vmatpush.msra.mxu0 %v244
      %294 = vmatpush.msra.mxu0 %v243
      %295 = vmatpush.msra.mxu0 %v242
      %296 = vmatpush.msra.mxu0 %v241
      %297 = vmatpush.msra.mxu0 %v240
      %298 = vmatpush.msra.mxu0 %v239
      %299 = vmatpush.msra.mxu0 %v238
      %300 = vmatmul.f32.gmra.mxu0 %v257
      %v301 = vpop.f32.mrf.mxu0
      %v302 = vadd.f32 %v266, %v301
      %303 = vmatmul.f32.gmra.mxu0 %v259
      %v304 = vpop.f32.mrf.mxu0
      %v305 = vadd.f32 %v271, %v304
      %306 = vdwg.mxu0
      %307 = vmatpush.msra.mxu0 0.0
      %308 = vmatpush.msra.mxu0 0.0
      %309 = vmatpush.msra.mxu0 0.0
      %310 = vmatpush.msra.mxu0 0.0
      %311 = vmatpush.msra.mxu0 0.0
      %312 = vmatpush.msra.mxu0 0.0
      %313 = vmatpush.msra.mxu0 0.0
      %314 = vmatpush.msra.mxu0 0.0
      %315 = vmatpush.msra.mxu0 0.0
      %316 = vmatpush.msra.mxu0 0.0
      %317 = vmatpush.msra.mxu0 0.0
      %318 = vmatpush.msra.mxu0 0.0
      %319 = vmatpush.msra.mxu0 0.0
      %320 = vmatpush.msra.mxu0 %v282
      %321 = vmatpush.msra.mxu0 %v255
      %322 = vmatpush.msra.mxu0 %v254
      %323 = vmatmul.f32.gmra.mxu0 %v275
      %v324 = vpop.f32.mrf.mxu0
      %v325 = vadd.f32 %v302, %v324
      %326 = vmatmul.f32.gmra.mxu0 %v278
      %v327 = vpop.f32.mrf.mxu0
      %v328 = vadd.f32 %v305, %v327
      %329 = vdwg.mxu0
      %vm330 = vcmask 818176
      %331 = vst.msk [vmem:[%s232] sm:$0xff] %vm330, %v325
      %332 = vst.msk [vmem:[%s232 + $0x8] sm:$0xff] %vm330, %v328
      %v333 = vtanh.pop %v325
      %v334 = vtanh.pop %v328
      %337 = vrot.lane.b32.xlu0 %v333, 127
      %v338 = vpop.permute.xlu0 %337
      %339 = vrot.lane.b32.xlu0 %v334, 127
      %v340 = vpop.permute.xlu0 %339
      %v343 = vmax.f32 %v333, %v338
      %v344 = vmax.f32 %v334, %v340
      %347 = vrot.lane.b32.xlu0 %v343, 118
      %v348 = vpop.permute.xlu0 %347
      %349 = vrot.lane.b32.xlu0 %v344, 118
      %v350 = vpop.permute.xlu0 %349
      %v353 = vmax.f32 %v343, %v348
      %v354 = vmax.f32 %v344, %v350
      %v355 = vld [vmem:[%s3] sm:$0xff]
      %v356 = vld [vmem:[%s3 + $0x8] sm:$0xff]
      %v357 = vld [vmem:[%s3 + $0x10] sm:$0xff]
      %v358 = vld [vmem:[%s3 + $0x18] sm:$0xff]
      %v359 = vld [vmem:[%s3 + $0x20] sm:$0xff]
      %v360 = vld [vmem:[%s3 + $0x28] sm:$0xff]
      %v361 = vld [vmem:[%s3 + $0x30] sm:$0xff]
      %v362 = vld [vmem:[%s3 + $0x38] sm:$0xff]
      %v363 = vld [vmem:[%s3 + $0x40] sm:$0xff]
      %v364 = vld [vmem:[%s3 + $0x48] sm:$0xff]
      %v365 = vld [vmem:[%s3 + $0x50] sm:$0xff]
      %v366 = vld [vmem:[%s3 + $0x58] sm:$0x1]
      %vm367 = vcmask 728064
      %v369 = vsel %vm367, %v353, 0
      %v372 = vsel %vm367, %v354, 0
      %vm374 = vcmask 1040384
      %v376 = vsel %vm374, %v366, 0
      %378 = vmatpush.msra.mxu0 0.0
      %379 = vmatpush.msra.mxu0 0.0
      %380 = vmatpush.msra.mxu0 0.0
      %381 = vmatpush.msra.mxu0 0.0
      %382 = vmatpush.msra.mxu0 %v376
      %383 = vmatpush.msra.mxu0 %v365
      %384 = vmatpush.msra.mxu0 %v364
      %385 = vmatpush.msra.mxu0 %v363
      %386 = vmatpush.msra.mxu0 %v362
      %387 = vmatpush.msra.mxu0 %v361
      %388 = vmatpush.msra.mxu0 %v360
      %389 = vmatpush.msra.mxu0 %v359
      %390 = vmatpush.msra.mxu0 %v358
      %391 = vmatpush.msra.mxu0 %v357
      %392 = vmatpush.msra.mxu0 %v356
      %393 = vmatpush.msra.mxu0 %v355
      %394 = vmatmul.f32.gmra.mxu0 %v369
      %v395 = vpop.f32.mrf.mxu0
      %v396 = vadd.f32 0.0, %v395
      %397 = vmatmul.f32.gmra.mxu0 %v372
      %v398 = vpop.f32.mrf.mxu0
      %v399 = vadd.f32 0.0, %v398
      %400 = vdwg.mxu0
      %vm401 = vcmask 203776
      %402 = vst.msk [vmem:[%s237] sm:$0xff] %vm401, %v396
      %403 = vst.msk [vmem:[%s237 + $0x8] sm:$0xff] %vm401, %v399
      %p404 = scmp.lt.s32.totalorder %s17, 1
      %s405 = scalar_select %p404, %s17, 1
      %s406 = smul.addr %s405, 2
      %s407 = smul.addr %s406, 8
      %s408 = scalar_lea.vmem %s4, %s407
      %p409 = scmp.lt.s32.totalorder %s17, 1
      %s410 = scalar_select %p409, %s17, 1
      %s411 = smul.addr %s410, 2
      %s412 = smul.addr %s411, 8
      %s413 = scalar_lea.vmem %s5, %s412
      // Predicated region
      $region37: #{lenet5_forward.4} parent=35 // pred_check
        %p414 = pneg %p124
      $region38: #{lenet5_forward.4} parent=35 // pred_check_branch
        %416 = sbr.rel (%p414) target = $region40
      $region39: #{lenet5_forward.4} parent=35 // pred_region
        _
      $region40: #{lenet5_forward.4} parent=35 // pred_fallthru
        _
      // Predicated region
      $region41: #{lenet5_forward.4} parent=35 // pred_check
        %p417 = pneg %p150
      $region42: #{lenet5_forward.4} parent=35 // pred_check_branch
        %419 = sbr.rel (%p417) target = $region44
      $region43: #{lenet5_forward.4} parent=35 // pred_region
        _
      $region44: #{lenet5_forward.4} parent=35 // pred_fallthru
        _
    $region36: #{lenet5_forward.4} parent=5 // pred_fallthru
      _
    %p420 = scmp.le.s32.totalorder 2, %s12
    // Predicated region
    $region45: #{lenet5_forward.4} parent=5 // pred_check
      %p421 = pneg %p420
    $region46: #{lenet5_forward.4} parent=5 // pred_check_branch
      %423 = sbr.rel (%p421) target = $region48
    $region47: #{lenet5_forward.4} parent=5 // pred_region
      %s424 = ssub.s32 %s12, 2
      // Predicated region
      $region49: #{lenet5_forward.4} parent=47 // pred_check
        %p425 = pneg %p130
      $region50: #{lenet5_forward.4} parent=47 // pred_check_branch
        %427 = sbr.rel (%p425) target = $region52
      $region51: #{lenet5_forward.4} parent=47 // pred_region
        %p428 = scmp.lt.s32.totalorder %s18, 1
        %s429 = scalar_select %p428, %s18, 1
        %s430 = smul.addr %s429, 2
        %s431 = smul.addr %s430, 8
        %s432 = scalar_lea.vmem %s4, %s431
      $region52: #{lenet5_forward.4} parent=47 // pred_fallthru
        _
      // Predicated region
      $region53: #{lenet5_forward.4} parent=47 // pred_check
        %p433 = pneg %p156
      $region54: #{lenet5_forward.4} parent=47 // pred_check_branch
        %435 = sbr.rel (%p433) target = $region56
      $region55: #{lenet5_forward.4} parent=47 // pred_region
        %p436 = scmp.lt.s32.totalorder %s18, 1
        %s437 = scalar_select %p436, %s18, 1
        %s438 = smul.addr %s437, 2
        %s439 = smul.addr %s438, 8
        %s440 = scalar_lea.vmem %s5, %s439
      $region56: #{lenet5_forward.4} parent=47 // pred_fallthru
        _
    $region48: #{lenet5_forward.4} parent=5 // pred_fallthru
      _
  $region6: #{lenet5_forward.4} parent=0 // loop_footer
    %s16 = sadd.s32 1, %s12
  $region7: #{lenet5_forward.4} parent=0 // loop_footer_branch
    %11 = sbr.rel target = $region3
  $region8: #{lenet5_forward.4} parent=0 // loop_exit
    _

// kernel: lenet5_forward.5
$region0: #{lenet5_forward.5}
  #allocation0 [shape = 'u32[]', space=smem, size = 0x4, offset = 0x4, fixed_abs, tag = 'smem constant byte address 0x4 - core index']
  #allocation1 [shape = 'u32[72,128]{1,0:T(1,128)}', space=vmem, size = 0x9000, scoped, tag = 'internal scratch']
  %s0 = inlined_call_operand.vmem [shape: f32[2,400], index: 0, kind: input, shape index: {}]
  %s1 = inlined_call_operand.vmem [shape: f32[400,120], index: 1, kind: input, shape index: {}]
  %s2 = inlined_call_operand.vmem [shape: f32[1,120], index: 2, kind: input, shape index: {}]
  %s3 = inlined_call_operand.vmem [shape: f32[120,84], index: 3, kind: input, shape index: {}]
  %s4 = inlined_call_operand.vmem [shape: f32[1,84], index: 4, kind: input, shape index: {}]
  %s5 = inlined_call_operand.vmem [shape: f32[84,10], index: 5, kind: input, shape index: {}]
  %s6 = inlined_call_operand.vmem [shape: f32[1,10], index: 6, kind: input, shape index: {}]
  %s7 = inlined_call_operand.hbm [shape: f32[2,120], index: 7, kind: output, shape index: {0}]
  %s8 = inlined_call_operand.hbm [shape: f32[2,120], index: 8, kind: output, shape index: {1}]
  %s9 = inlined_call_operand.hbm [shape: f32[2,84], index: 9, kind: output, shape index: {2}]
  %s10 = inlined_call_operand.hbm [shape: f32[2,84], index: 10, kind: output, shape index: {3}]
  %s11 = inlined_call_operand.vmem [shape: f32[2,10], index: 11, kind: output, shape index: {4}]
  %12 = xla_tuple %s7, %s8, %s9, %s10, %s11
  %s13 = sld [smem:[#allocation0]]
  $region70: #{lenet5_forward.5} parent=0
    _
  %s15 = ssub.s32 1, %s13
  %s16 = scalar_select 0, %s15, %s13
  $region1: #{lenet5_forward.5} parent=0
    #allocation2 [shape = 'u8[1024]{0}', space=vmem, size = 0x400, scoped, tag = 'output window, operand 0, single buffered']
    #allocation3 [shape = 's32[1]{0}', space=sflag, size = 0x4, scoped, tag = 'scoped memory for lenet5_forward.5']
    #allocation4 [shape = 'u8[1024]{0}', space=vmem, size = 0x400, scoped, tag = 'output window, operand 1, single buffered']
    #allocation5 [shape = 's32[1]{0}', space=sflag, size = 0x4, scoped, tag = 'scoped memory for lenet5_forward.5']
    #allocation6 [shape = 'u8[1024]{0}', space=vmem, size = 0x400, scoped, tag = 'output window, operand 2, single buffered']
    #allocation7 [shape = 'u8[1024]{0}', space=vmem, size = 0x400, scoped, tag = 'output window, operand 3, single buffered']
    #allocation8 [shape = 's32[1]{0}', space=sflag, size = 0x4, scoped, tag = 'scoped memory for lenet5_forward.5']
    %17 = vsyncpa [#allocation3], 0
    %18 = vsyncpa [#allocation5], 0
    %19 = vsyncpa [#allocation8], 0
    // Predicated region
    $region2: #{lenet5_forward.5} parent=1 // pred_check
      _
    $region3: #{lenet5_forward.5} parent=1 // pred_check_branch
      %21 = sbr.rel (0) target = $region5
    $region4: #{lenet5_forward.5} parent=1 // pred_region
      _
    $region5: #{lenet5_forward.5} parent=1 // pred_fallthru
      _
    // Predicated region
    $region6: #{lenet5_forward.5} parent=1 // pred_check
      _
    $region7: #{lenet5_forward.5} parent=1 // pred_check_branch
      %23 = sbr.rel (0) target = $region9
    $region8: #{lenet5_forward.5} parent=1 // pred_region
      _
    $region9: #{lenet5_forward.5} parent=1 // pred_fallthru
      _
    // Predicated region
    $region10: #{lenet5_forward.5} parent=1 // pred_check
      _
    $region11: #{lenet5_forward.5} parent=1 // pred_check_branch
      %25 = sbr.rel (0) target = $region13
    $region12: #{lenet5_forward.5} parent=1 // pred_region
      _
    $region13: #{lenet5_forward.5} parent=1 // pred_fallthru
      _
    // Predicated region
    $region14: #{lenet5_forward.5} parent=1 // pred_check
      _
    $region15: #{lenet5_forward.5} parent=1 // pred_check_branch
      %27 = sbr.rel (0) target = $region17
    $region16: #{lenet5_forward.5} parent=1 // pred_region
      _
    $region17: #{lenet5_forward.5} parent=1 // pred_fallthru
      _
    // Predicated region
    $region18: #{lenet5_forward.5} parent=1 // pred_check
      _
    $region19: #{lenet5_forward.5} parent=1 // pred_check_branch
      %29 = sbr.rel (0) target = $region21
    $region20: #{lenet5_forward.5} parent=1 // pred_region
      _
    $region21: #{lenet5_forward.5} parent=1 // pred_fallthru
      _
    // Predicated region
    $region22: #{lenet5_forward.5} parent=1 // pred_check
      _
    $region23: #{lenet5_forward.5} parent=1 // pred_check_branch
      %31 = sbr.rel (0) target = $region25
    $region24: #{lenet5_forward.5} parent=1 // pred_region
      _
    $region25: #{lenet5_forward.5} parent=1 // pred_fallthru
      _
    // Predicated region
    $region26: #{lenet5_forward.5} parent=1 // pred_check
      _
    $region27: #{lenet5_forward.5} parent=1 // pred_check_branch
      %33 = sbr.rel (0) target = $region29
    $region28: #{lenet5_forward.5} parent=1 // pred_region
      _
    $region29: #{lenet5_forward.5} parent=1 // pred_fallthru
      _
    %v34 = vld [vmem:[%s0] sm:$0xff]
    %v35 = vld [vmem:[%s1] sm:$0xff]
    %v36 = vld [vmem:[%s1 + $0x8] sm:$0xff]
    %v37 = vld [vmem:[%s1 + $0x10] sm:$0xff]
    %v38 = vld [vmem:[%s1 + $0x18] sm:$0xff]
    %v39 = vld [vmem:[%s1 + $0x20] sm:$0xff]
    %v40 = vld [vmem:[%s1 + $0x28] sm:$0xff]
    %v41 = vld [vmem:[%s1 + $0x30] sm:$0xff]
    %v42 = vld [vmem:[%s1 + $0x38] sm:$0xff]
    %v43 = vld [vmem:[%s1 + $0x40] sm:$0xff]
    %v44 = vld [vmem:[%s1 + $0x48] sm:$0xff]
    %v45 = vld [vmem:[%s1 + $0x50] sm:$0xff]
    %v46 = vld [vmem:[%s1 + $0x58] sm:$0xff]
    %v47 = vld [vmem:[%s1 + $0x60] sm:$0xff]
    %v48 = vld [vmem:[%s1 + $0x68] sm:$0xff]
    %v49 = vld [vmem:[%s1 + $0x70] sm:$0xff]
    %v50 = vld [vmem:[%s1 + $0x78] sm:$0xff]
    %v51 = vld [vmem:[%s1 + $0x80] sm:$0xff]
    %v52 = vld [vmem:[%s1 + $0x88] sm:$0xff]
    %v53 = vld [vmem:[%s1 + $0x90] sm:$0xff]
    %v54 = vld [vmem:[%s1 + $0x98] sm:$0xff]
    %v55 = vld [vmem:[%s1 + $0xa0] sm:$0xff]
    %v56 = vld [vmem:[%s1 + $0xa8] sm:$0xff]
    %v57 = vld [vmem:[%s1 + $0xb0] sm:$0xff]
    %v58 = vld [vmem:[%s1 + $0xb8] sm:$0xff]
    %v59 = vld [vmem:[%s1 + $0xc0] sm:$0xff]
    %v60 = vld [vmem:[%s1 + $0xc8] sm:$0xff]
    %v61 = vld [vmem:[%s1 + $0xd0] sm:$0xff]
    %v62 = vld [vmem:[%s1 + $0xd8] sm:$0xff]
    %v63 = vld [vmem:[%s1 + $0xe0] sm:$0xff]
    %v64 = vld [vmem:[%s1 + $0xe8] sm:$0xff]
    %v65 = vld [vmem:[%s1 + $0xf0] sm:$0xff]
    %v66 = vld [vmem:[%s1 + $0xf8] sm:$0xff]
    %v67 = vld [vmem:[%s1 + $0x100] sm:$0xff]
    %v68 = vld [vmem:[%s1 + $0x108] sm:$0xff]
    %v69 = vld [vmem:[%s1 + $0x110] sm:$0xff]
    %v70 = vld [vmem:[%s1 + $0x118] sm:$0xff]
    %v71 = vld [vmem:[%s1 + $0x120] sm:$0xff]
    %v72 = vld [vmem:[%s1 + $0x128] sm:$0xff]
    %v73 = vld [vmem:[%s1 + $0x130] sm:$0xff]
    %v74 = vld [vmem:[%s1 + $0x138] sm:$0xff]
    %v75 = vld [vmem:[%s1 + $0x140] sm:$0xff]
    %v76 = vld [vmem:[%s1 + $0x148] sm:$0xff]
    %v77 = vld [vmem:[%s1 + $0x150] sm:$0xff]
    %v78 = vld [vmem:[%s1 + $0x158] sm:$0xff]
    %v79 = vld [vmem:[%s1 + $0x160] sm:$0xff]
    %v80 = vld [vmem:[%s1 + $0x168] sm:$0xff]
    %v81 = vld [vmem:[%s1 + $0x170] sm:$0xff]
    %v82 = vld [vmem:[%s1 + $0x178] sm:$0xff]
    %v83 = vld [vmem:[%s1 + $0x180] sm:$0xff]
    %v84 = vld [vmem:[%s1 + $0x188] sm:$0xff]
    %v85 = vld [vmem:[%s2] sm:$0x1]
    %v87 = vperm.slane %v85, 0
    %90 = vst [vmem:[#allocation1] ss:$4 sm:$0xff] %v34
    %v91 = vld.sshfl [vmem:[#allocation1] sm:$0xff pattern:$0x73625140]
    %v92 = vld.sshfl [vmem:[#allocation1 + $0x8] sm:$0xff pattern:$0x73625140]
    %v93 = vld.sshfl [vmem:[#allocation1 + $0x10] sm:$0xff pattern:$0x73625140]
    %v94 = vld.sshfl [vmem:[#allocation1 + $0x18] sm:$0xff pattern:$0x73625140]
    %vm98 = vcmask 130048
    %v99 = vsel %vm98, %v94, 0
    %101 = vmatpush.msra.mxu0 %v50
    %102 = vmatpush.msra.mxu0 %v49
    %103 = vmatpush.msra.mxu0 %v48
    %104 = vmatpush.msra.mxu0 %v47
    %105 = vmatpush.msra.mxu0 %v46
    %106 = vmatpush.msra.mxu0 %v45
    %107 = vmatpush.msra.mxu0 %v44
    %108 = vmatpush.msra.mxu0 %v43
    %109 = vmatpush.msra.mxu0 %v42
    %110 = vmatpush.msra.mxu0 %v41
    %111 = vmatpush.msra.mxu0 %v40
    %112 = vmatpush.msra.mxu0 %v39
    %113 = vmatpush.msra.mxu0 %v38
    %114 = vmatpush.msra.mxu0 %v37
    %115 = vmatpush.msra.mxu0 %v36
    %116 = vmatpush.msra.mxu0 %v35
    %117 = vmatmul.f32.gmra.mxu0 %v91
    %v118 = vpop.f32.mrf.mxu0
    %v119 = vadd.f32 %v87, %v118
    %120 = vdwg.mxu0
    %121 = vmatpush.msra.mxu0 %v66
    %122 = vmatpush.msra.mxu0 %v65
    %123 = vmatpush.msra.mxu0 %v64
    %124 = vmatpush.msra.mxu0 %v63
    %125 = vmatpush.msra.mxu0 %v62
    %126 = vmatpush.msra.mxu0 %v61
    %127 = vmatpush.msra.mxu0 %v60
    %128 = vmatpush.msra.mxu0 %v59
    %129 = vmatpush.msra.mxu0 %v58
    %130 = vmatpush.msra.mxu0 %v57
    %131 = vmatpush.msra.mxu0 %v56
    %132 = vmatpush.msra.mxu0 %v55
    %133 = vmatpush.msra.mxu0 %v54
    %134 = vmatpush.msra.mxu0 %v53
    %135 = vmatpush.msra.mxu0 %v52
    %136 = vmatpush.msra.mxu0 %v51
    %137 = vmatmul.f32.gmra.mxu0 %v92
    %v138 = vpop.f32.mrf.mxu0
    %v139 = vadd.f32 %v119, %v138
    %140 = vdwg.mxu0
    %141 = vmatpush.msra.mxu0 %v82
    %142 = vmatpush.msra.mxu0 %v81
    %143 = vmatpush.msra.mxu0 %v80
    %144 = vmatpush.msra.mxu0 %v79
    %145 = vmatpush.msra.mxu0 %v78
    %146 = vmatpush.msra.mxu0 %v77
    %147 = vmatpush.msra.mxu0 %v76
    %148 = vmatpush.msra.mxu0 %v75
    %149 = vmatpush.msra.mxu0 %v74
    %150 = vmatpush.msra.mxu0 %v73
    %151 = vmatpush.msra.mxu0 %v72
    %152 = vmatpush.msra.mxu0 %v71
    %153 = vmatpush.msra.mxu0 %v70
    %154 = vmatpush.msra.mxu0 %v69
    %155 = vmatpush.msra.mxu0 %v68
    %156 = vmatpush.msra.mxu0 %v67
    %157 = vmatmul.f32.gmra.mxu0 %v93
    %v158 = vpop.f32.mrf.mxu0
    %v159 = vadd.f32 %v139, %v158
    %160 = vdwg.mxu0
    %161 = vmatpush.msra.mxu0 0.0
    %162 = vmatpush.msra.mxu0 0.0
    %163 = vmatpush.msra.mxu0 0.0
    %164 = vmatpush.msra.mxu0 0.0
    %165 = vmatpush.msra.mxu0 0.0
    %166 = vmatpush.msra.mxu0 0.0
    %167 = vmatpush.msra.mxu0 0.0
    %168 = vmatpush.msra.mxu0 0.0
    %169 = vmatpush.msra.mxu0 0.0
    %170 = vmatpush.msra.mxu0 0.0
    %171 = vmatpush.msra.mxu0 0.0
    %172 = vmatpush.msra.mxu0 0.0
    %173 = vmatpush.msra.mxu0 0.0
    %174 = vmatpush.msra.mxu0 0.0
    %175 = vmatpush.msra.mxu0 %v84
    %176 = vmatpush.msra.mxu0 %v83
    %177 = vmatmul.f32.gmra.mxu0 %v99
    %v178 = vpop.f32.mrf.mxu0
    %v179 = vadd.f32 %v159, %v178
    %180 = vdwg.mxu0
    %vm181 = vcmask 975872
    %182 = vst.msk [vmem:[#allocation2] sm:$0x3] %vm181, %v179
    %v183 = vtanh.pop %v179
    %184 = vst.msk [vmem:[#allocation4] sm:$0x3] %vm181, %v183
    %v185 = vld [vmem:[%s3] sm:$0xff]
    %v186 = vld [vmem:[%s3 + $0x8] sm:$0xff]
    %v187 = vld [vmem:[%s3 + $0x10] sm:$0xff]
    %v188 = vld [vmem:[%s3 + $0x18] sm:$0xff]
    %v189 = vld [vmem:[%s3 + $0x20] sm:$0xff]
    %v190 = vld [vmem:[%s3 + $0x28] sm:$0xff]
    %v191 = vld [vmem:[%s3 + $0x30] sm:$0xff]
    %v192 = vld [vmem:[%s3 + $0x38] sm:$0xff]
    %v193 = vld [vmem:[%s3 + $0x40] sm:$0xff]
    %v194 = vld [vmem:[%s3 + $0x48] sm:$0xff]
    %v195 = vld [vmem:[%s3 + $0x50] sm:$0xff]
    %v196 = vld [vmem:[%s3 + $0x58] sm:$0xff]
    %v197 = vld [vmem:[%s3 + $0x60] sm:$0xff]
    %v198 = vld [vmem:[%s3 + $0x68] sm:$0xff]
    %v199 = vld [vmem:[%s3 + $0x70] sm:$0xff]
    %v200 = vld [vmem:[%s4] sm:$0x1]
    %v202 = vperm.slane %v200, 0
    %vm204 = vcmask 982016
    %v206 = vsel %vm204, %v183, 0
    %208 = vmatpush.msra.mxu0 0.0
    %209 = vmatpush.msra.mxu0 %v199
    %210 = vmatpush.msra.mxu0 %v198
    %211 = vmatpush.msra.mxu0 %v197
    %212 = vmatpush.msra.mxu0 %v196
    %213 = vmatpush.msra.mxu0 %v195
    %214 = vmatpush.msra.mxu0 %v194
    %215 = vmatpush.msra.mxu0 %v193
    %216 = vmatpush.msra.mxu0 %v192
    %217 = vmatpush.msra.mxu0 %v191
    %218 = vmatpush.msra.mxu0 %v190
    %219 = vmatpush.msra.mxu0 %v189
    %220 = vmatpush.msra.mxu0 %v188
    %221 = vmatpush.msra.mxu0 %v187
    %222 = vmatpush.msra.mxu0 %v186
    %223 = vmatpush.msra.mxu0 %v185
    %224 = vmatmul.f32.gmra.mxu0 %v206
    %v225 = vpop.f32.mrf.mxu0
    %v226 = vadd.f32 %v202, %v225
    %227 = vdwg.mxu0
    %vm228 = vcmask 680960
    %229 = vst.msk [vmem:[#allocation6] sm:$0x3] %vm228, %v226
    %v230 = vtanh.pop %v226
    %231 = vst.msk [vmem:[#allocation7] sm:$0x3] %vm228, %v230
    %v232 = vld [vmem:[%s5] sm:$0xff]
    %v233 = vld [vmem:[%s5 + $0x8] sm:$0xff]
    %v234 = vld [vmem:[%s5 + $0x10] sm:$0xff]
    %v235 = vld [vmem:[%s5 + $0x18] sm:$0xff]
    %v236 = vld [vmem:[%s5 + $0x20] sm:$0xff]
    %v237 = vld [vmem:[%s5 + $0x28] sm:$0xff]
    %v238 = vld [vmem:[%s5 + $0x30] sm:$0xff]
    %v239 = vld [vmem:[%s5 + $0x38] sm:$0xff]
    %v240 = vld [vmem:[%s5 + $0x40] sm:$0xff]
    %v241 = vld [vmem:[%s5 + $0x48] sm:$0xff]
    %v242 = vld [vmem:[%s5 + $0x50] sm:$0xf]
    %v243 = vld [vmem:[%s6] sm:$0x1]
    %v245 = vperm.slane %v243, 0
    %vm247 = vcmask 687104
    %v249 = vsel %vm247, %v230, 0
    %vm251 = vcmask 1043456
    %v253 = vsel %vm251, %v242, 0
    %255 = vmatpush.msra.mxu0 0.0
    %256 = vmatpush.msra.mxu0 0.0
    %257 = vmatpush.msra.mxu0 0.0
    %258 = vmatpush.msra.mxu0 0.0
    %259 = vmatpush.msra.mxu0 0.0
    %260 = vmatpush.msra.mxu0 %v253
    %261 = vmatpush.msra.mxu0 %v241
    %262 = vmatpush.msra.mxu0 %v240
    %263 = vmatpush.msra.mxu0 %v239
    %264 = vmatpush.msra.mxu0 %v238
    %265 = vmatpush.msra.mxu0 %v237
    %266 = vmatpush.msra.mxu0 %v236
    %267 = vmatpush.msra.mxu0 %v235
    %268 = vmatpush.msra.mxu0 %v234
    %269 = vmatpush.msra.mxu0 %v233
    %270 = vmatpush.msra.mxu0 %v232
    %271 = vmatmul.f32.gmra.mxu0 %v249
    %v272 = vpop.f32.mrf.mxu0
    %v273 = vadd.f32 %v245, %v272
    %274 = vdwg.mxu0
    %vm275 = vcmask 74752
    %276 = vst.msk [vmem:[%s11] sm:$0x3] %vm275, %v273
    // Predicated region
    $region30: #{lenet5_forward.5} parent=1 // pred_check
      _
    $region31: #{lenet5_forward.5} parent=1 // pred_check_branch
      %278 = sbr.rel (0) target = $region33
    $region32: #{lenet5_forward.5} parent=1 // pred_region
      %280 = vsyncadd [#allocation3], 0
      %s282 = sshll.u32 [#allocation2], 4
      %s283 = int_to_ptr.vmem [resolvable:$true] %s282
      %s284 = sshll.u32 %s7, 4
      %s285 = int_to_ptr.hbm [resolvable:$true] %s284
      %287 = dma.vmem_to_hbm [thread:$0]  %s283, 32, %s285, [#allocation3]
    $region33: #{lenet5_forward.5} parent=1 // pred_fallthru
      _
    // Predicated region
    $region34: #{lenet5_forward.5} parent=1 // pred_check
      _
    $region35: #{lenet5_forward.5} parent=1 // pred_check_branch
      %289 = sbr.rel (0) target = $region37
    $region36: #{lenet5_forward.5} parent=1 // pred_region
      %291 = vsyncadd [#allocation5], 0
      %s293 = sshll.u32 [#allocation4], 4
      %s294 = int_to_ptr.vmem [resolvable:$true] %s293
      %s295 = sshll.u32 %s8, 4
      %s296 = int_to_ptr.hbm [resolvable:$true] %s295
      %298 = dma.vmem_to_hbm [thread:$0]  %s294, 32, %s296, [#allocation5]
    $region37: #{lenet5_forward.5} parent=1 // pred_fallthru
      _
    // Predicated region
    $region38: #{lenet5_forward.5} parent=1 // pred_check
      _
    $region39: #{lenet5_forward.5} parent=1 // pred_check_branch
      %300 = sbr.rel (0) target = $region41
    $region40: #{lenet5_forward.5} parent=1 // pred_region
      %302 = vsyncadd [#allocation5], 0
      %s304 = sshll.u32 [#allocation6], 4
      %s305 = int_to_ptr.vmem [resolvable:$true] %s304
      %s306 = sshll.u32 %s9, 4
      %s307 = int_to_ptr.hbm [resolvable:$true] %s306
      %309 = dma.vmem_to_hbm [thread:$0]  %s305, 32, %s307, [#allocation5]
    $region41: #{lenet5_forward.5} parent=1 // pred_fallthru
      _
    // Predicated region
    $region42: #{lenet5_forward.5} parent=1 // pred_check
      _
    $region43: #{lenet5_forward.5} parent=1 // pred_check_branch
      %311 = sbr.rel (0) target = $region45
    $region44: #{lenet5_forward.5} parent=1 // pred_region
      %313 = vsyncadd [#allocation8], 0
      %s315 = sshll.u32 [#allocation7], 4
      %s316 = int_to_ptr.vmem [resolvable:$true] %s315
      %s317 = sshll.u32 %s10, 4
      %s318 = int_to_ptr.hbm [resolvable:$true] %s317
      %320 = dma.vmem_to_hbm [thread:$0]  %s316, 32, %s318, [#allocation8]
    $region45: #{lenet5_forward.5} parent=1 // pred_fallthru
      _
    // Predicated region
    $region46: #{lenet5_forward.5} parent=1 // pred_check
      _
    $region47: #{lenet5_forward.5} parent=1 // pred_check_branch
      %322 = sbr.rel (0) target = $region49
    $region48: #{lenet5_forward.5} parent=1 // pred_region
      _
    $region49: #{lenet5_forward.5} parent=1 // pred_fallthru
      _
    // Predicated region
    $region50: #{lenet5_forward.5} parent=1 // pred_check
      _
    $region51: #{lenet5_forward.5} parent=1 // pred_check_branch
      %324 = sbr.rel (0) target = $region53
    $region52: #{lenet5_forward.5} parent=1 // pred_region
      %326 = dma.done [#allocation3], 32
    $region53: #{lenet5_forward.5} parent=1 // pred_fallthru
      _
    // Predicated region
    $region54: #{lenet5_forward.5} parent=1 // pred_check
      _
    $region55: #{lenet5_forward.5} parent=1 // pred_check_branch
      %328 = sbr.rel (0) target = $region57
    $region56: #{lenet5_forward.5} parent=1 // pred_region
      %330 = dma.done [#allocation5], 32
    $region57: #{lenet5_forward.5} parent=1 // pred_fallthru
      _
    // Predicated region
    $region58: #{lenet5_forward.5} parent=1 // pred_check
      _
    $region59: #{lenet5_forward.5} parent=1 // pred_check_branch
      %332 = sbr.rel (0) target = $region61
    $region60: #{lenet5_forward.5} parent=1 // pred_region
      %334 = dma.done [#allocation5], 32
    $region61: #{lenet5_forward.5} parent=1 // pred_fallthru
      _
    // Predicated region
    $region62: #{lenet5_forward.5} parent=1 // pred_check
      _
    $region63: #{lenet5_forward.5} parent=1 // pred_check_branch
      %336 = sbr.rel (0) target = $region65
    $region64: #{lenet5_forward.5} parent=1 // pred_region
      %338 = dma.done [#allocation8], 32
    $region65: #{lenet5_forward.5} parent=1 // pred_fallthru
      _
    // Predicated region
    $region66: #{lenet5_forward.5} parent=1 // pred_check
      _
    $region67: #{lenet5_forward.5} parent=1 // pred_check_branch
      %340 = sbr.rel (0) target = $region69
    $region68: #{lenet5_forward.5} parent=1 // pred_region
      _
    $region69: #{lenet5_forward.5} parent=1 // pred_fallthru
      _
    %341 = vsyncpa [#allocation3], 1
    %342 = vsyncpa [#allocation5], 1
    %343 = vsyncpa [#allocation8], 1

</llo_original>
